<compile_context>
chip_gen: v7x
topology: tpu7x:2x2x1
jax: 0.10.0
libtpu: 0.0.40
codegen_flags: <defaults>
</compile_context>

<pallas_src>
import numpy as np
import jax
import jax.numpy as jnp
from jax.experimental import pallas as pl
from jax.experimental.pallas import tpu as pltpu


def make_tcnn_kernel(layer_cfg, *, B, L, K, compute_dtype):
    """layer_cfg: per-TemporalBlock static dicts {'has_down': bool, 'dilation': int}."""
    BL = B * L

    def kernel(*refs):
        x_ref, out_ref = refs[0], refs[-1]
        idx = 1

        c_in = x_ref.shape[-1]
        h = x_ref[...].reshape(BL, c_in).astype(jnp.float32)        # (B*L, C_in)

        # Per-sequence time index of every flattened row (hoisted, computed once).
        row_t = jax.lax.broadcasted_iota(jnp.int32, (BL, 1), 0) % L

        def shift_time(v, s):
            # v[t] -> v[t - s] within each sequence, zero-filled for t < s.
            if s == 0:
                return v
            if s >= L:                      # receptive field fully out of range
                return jnp.zeros_like(v)
            rolled = pltpu.roll(v, s, 0)    # XLU sublane rotate (no MXU work)
            # mask = causal zero-fill + sequence-boundary isolation
            return jnp.where(row_t >= s, rolled, 0.0)

        def causal_conv(v, w_ref, b_ref, d):
            # w_ref: (K*C_in, C_out), rows ordered tap-major (k*C_in + c), which
            # matches the concat order below -> a single fused MXU matmul.
            taps = [shift_time(v, (K - 1 - k) * d) for k in range(K)]
            xc = taps[0] if K == 1 else jnp.concatenate(taps, axis=-1)
            y = jnp.dot(xc.astype(compute_dtype), w_ref[...],
                        preferred_element_type=jnp.float32)
            return y + b_ref[...]           # f32 bias, read exactly once

        for cfg in layer_cfg:
            w1, b1, w2, b2 = refs[idx:idx + 4]
            idx += 4
            if cfg["has_down"]:
                wd, bd = refs[idx:idx + 2]
                idx += 2
            else:
                wd = bd = None
            d = cfg["dilation"]
            out = jnp.maximum(causal_conv(h, w1, b1, d), 0.0)    # conv1+chomp+relu
            out = jnp.maximum(causal_conv(out, w2, b2, d), 0.0)  # conv2+chomp+relu
            if wd is None:
                res = h
            else:                                                # 1x1 downsample conv
                res = jnp.dot(h.astype(compute_dtype), wd[...],
                              preferred_element_type=jnp.float32) + bd[...]
            h = jnp.maximum(out + res, 0.0)                      # relu(out + res)

        (fc1_w, fc1_b, fc2_w, fc2_b,
         fc3_w, fc3_b, fc4_w, fc4_b) = refs[idx:idx + 8]

        # out[:, :, -1]: last timestep of every sequence via a static slice.
        z = h.reshape(B, L, h.shape[-1])[:, L - 1, :]            # (B, C_last)

        def dense(v, w_ref, b_ref):
            return jnp.dot(v.astype(compute_dtype), w_ref[...],
                           preferred_element_type=jnp.float32) + b_ref[...]

        # FC head on the whole batch of the block (dropout == identity at eval).
        z = jnp.maximum(dense(z, fc1_w, fc1_b), 0.0)
        z = jnp.maximum(dense(z, fc2_w, fc2_b), 0.0)
        z = jnp.maximum(dense(z, fc3_w, fc3_b), 0.0)
        z = dense(z, fc4_w, fc4_b)                               # (B, OUT_PAD) lane-dense
        out_ref[:, 0, :] = z.astype(out_ref.dtype)

    return kernel


def init_params(key, input_size, num_channels, kernel_size, hidden, output_size):
    """Deterministic synthetic parameters (weight_norm folded into weights)."""
    keys = iter(jax.random.split(key, 64))

    def nrm(shape, scale=0.1):
        return scale * jax.random.normal(next(keys), shape, dtype=jnp.float32)

    layers = []
    in_c = input_size
    for i, out_c in enumerate(num_channels):
        lyr = dict(
            dilation=2 ** i,
            w1=nrm((kernel_size, in_c, out_c)),     # conv1 taps: (K, Cin, Cout)
            b1=nrm((1, out_c)),
            w2=nrm((kernel_size, out_c, out_c)),    # conv2
            b2=nrm((1, out_c)),
        )
        if in_c != out_c:                           # downsample 1x1 conv
            lyr["wd"] = nrm((in_c, out_c))
            lyr["bd"] = nrm((1, out_c))
        layers.append(lyr)
        in_c = out_c

    fc = dict(
        fc1_w=nrm((num_channels[-1], hidden)), fc1_b=nrm((1, hidden)),
        fc2_w=nrm((hidden, hidden)),           fc2_b=nrm((1, hidden)),
        fc3_w=nrm((hidden, hidden)),           fc3_b=nrm((1, hidden)),
        fc4_w=nrm((hidden, output_size)),      fc4_b=nrm((1, output_size)),
    )
    return layers, fc


def tcnn_forward(x_ncl, layers, fc, *, param_dtype=jnp.bfloat16):
    """x_ncl: (N, C_in, L) as in PyTorch; returns (N, output_size) float32."""
    N, C_in, L = x_ncl.shape
    K = layers[0]["w1"].shape[0]

    x = jnp.transpose(x_ncl, (0, 2, 1)).astype(jnp.float32)      # -> (N, L, C_in)

    # Sequences per grid step: target ~128 MXU rows per block, but keep >= 2
    # grid steps when N > 1 so both v7x TensorCores get work.
    B = max(1, 128 // L)
    if N > 1:
        B = min(B, pl.cdiv(N, 2))
    B = max(1, min(B, N))
    G = pl.cdiv(N, B)
    N_pad = G * B
    if N_pad != N:
        x = jnp.concatenate([x, jnp.zeros((N_pad - N, L, C_in), x.dtype)], axis=0)

    # No per-layer L x L shift matrices anymore -> VMEM footprint is just the
    # (tiny) weights + one activation block; fits default scoped VMEM on
    # v5e/v6e/v7x without raising vmem_limit_bytes.
    param_list, cfg = [], []
    in_c = C_in
    for lyr in layers:
        out_c = lyr["w1"].shape[2]
        # Pack the K taps along the contraction dim: (K, Cin, Cout) -> (K*Cin, Cout)
        param_list += [lyr["w1"].reshape(K * in_c, out_c).astype(param_dtype),
                       lyr["b1"].astype(jnp.float32),
                       lyr["w2"].reshape(K * out_c, out_c).astype(param_dtype),
                       lyr["b2"].astype(jnp.float32)]
        has_down = "wd" in lyr
        if has_down:
            param_list += [lyr["wd"].astype(param_dtype),
                           lyr["bd"].astype(jnp.float32)]
        cfg.append(dict(has_down=has_down, dilation=int(lyr["dilation"])))
        in_c = out_c

    out_size = fc["fc4_w"].shape[1]
    OUT_PAD = pl.cdiv(out_size, 128) * 128                       # lane-dense output
    fc4_w = jnp.pad(fc["fc4_w"], ((0, 0), (0, OUT_PAD - out_size)))
    fc4_b = jnp.pad(fc["fc4_b"], ((0, 0), (0, OUT_PAD - out_size)))
    param_list += [fc["fc1_w"].astype(param_dtype), fc["fc1_b"].astype(jnp.float32),
                   fc["fc2_w"].astype(param_dtype), fc["fc2_b"].astype(jnp.float32),
                   fc["fc3_w"].astype(param_dtype), fc["fc3_b"].astype(jnp.float32),
                   fc4_w.astype(param_dtype), fc4_b.astype(jnp.float32)]

    def full_spec(a):
        zeros = (0,) * a.ndim
        return pl.BlockSpec(a.shape, lambda g, _z=zeros: _z)

    out = pl.pallas_call(
        make_tcnn_kernel(cfg, B=B, L=L, K=K, compute_dtype=param_dtype),
        out_shape=jax.ShapeDtypeStruct((N_pad, 1, OUT_PAD), jnp.float32),
        grid=(G,),
        in_specs=[pl.BlockSpec((B, L, C_in), lambda g: (g, 0, 0))]
                 + [full_spec(p) for p in param_list],
        out_specs=pl.BlockSpec((B, 1, OUT_PAD), lambda g: (g, 0, 0)),
        compiler_params=pltpu.CompilerParams(
            dimension_semantics=("parallel",)),   # batch axis across TCs
    )(x, *param_list)
    return out[:N, 0, :out_size]


def ref_forward(x_ncl, layers, fc):
    """Plain-JAX reference mirroring the PyTorch module (eval mode)."""
    def causal_conv(h, w, b, d):                   # h: (N, L, Cin)
        N, L, _ = h.shape
        K = w.shape[0]
        pad = (K - 1) * d
        xp = jnp.pad(h, ((0, 0), (pad, 0), (0, 0)))
        y = jnp.zeros((N, L, w.shape[2]), jnp.float32)
        for k in range(K):
            y = y + xp[:, k * d:k * d + L, :] @ w[k]
        return y + b

    h = jnp.transpose(x_ncl, (0, 2, 1))
    for lyr in layers:
        d = lyr["dilation"]
        out = jax.nn.relu(causal_conv(h, lyr["w1"], lyr["b1"], d))
        out = jax.nn.relu(causal_conv(out, lyr["w2"], lyr["b2"], d))
        res = h @ lyr["wd"] + lyr["bd"] if "wd" in lyr else h
        h = jax.nn.relu(out + res)
    z = h[:, -1, :]
    z = jax.nn.relu(z @ fc["fc1_w"] + fc["fc1_b"])
    z = jax.nn.relu(z @ fc["fc2_w"] + fc["fc2_b"])
    z = jax.nn.relu(z @ fc["fc3_w"] + fc["fc3_b"])
    return z @ fc["fc4_w"] + fc["fc4_b"]


def quantize_weights(layers, fc):
    """bf16-round the matmul weights (as the bf16 kernel does), keep f32 biases."""
    def q(a):
        return a.astype(jnp.bfloat16).astype(jnp.float32)
    layers_q = []
    for lyr in layers:
        lq = dict(lyr)
        for k in ("w1", "w2", "wd"):
            if k in lq:
                lq[k] = q(lq[k])
        layers_q.append(lq)
    fc_q = dict(fc)
    for k in ("fc1_w", "fc2_w", "fc3_w", "fc4_w"):
        fc_q[k] = q(fc_q[k])
    return layers_q, fc_q


if __name__ == "__main__":
    # Small hyper-parameters consistent with TCNN_Simple.__init__.
    input_size = 4
    output_size = 3
    num_channels = [8, 8]
    kernel_size = 2
    dropout = 0.2              # inference: nn.Dropout is identity
    FCNN_hidden_size = 32
    N, L = 13, 16              # exercises batch padding, B>1 blocks, 2 grid steps

    key = jax.random.PRNGKey(0)
    k_x, k_p = jax.random.split(key)
    layers, fc = init_params(k_p, input_size, num_channels, kernel_size,
                             FCNN_hidden_size, output_size)

    # PyTorch input convention: (N, C_in, L_in)
    x = jax.random.normal(k_x, (N, input_size, L), dtype=jnp.float32)

    # f32 weights: strict structural check against the plain-JAX reference.
    out_f32 = jax.block_until_ready(tcnn_forward(x, layers, fc,
                                                 param_dtype=jnp.float32))
    ref = jax.block_until_ready(ref_forward(x, layers, fc))
    np.testing.assert_allclose(np.asarray(out_f32), np.asarray(ref),
                               rtol=1e-2, atol=1e-4)

    # bf16 weights (MXU-native on v6e/v7x): compare against a reference that
    # uses the same bf16-rounded weights, with a bf16-appropriate tolerance.
    out_bf16 = jax.block_until_ready(tcnn_forward(x, layers, fc,
                                                  param_dtype=jnp.bfloat16))
    layers_q, fc_q = quantize_weights(layers, fc)
    ref_q = jax.block_until_ready(ref_forward(x, layers_q, fc_q))
    np.testing.assert_allclose(np.asarray(out_bf16), np.asarray(ref_q),
                               rtol=5e-2, atol=5e-3)

    print("KERNEL_OK")
</pallas_src>

<mosaic_0001>
module attributes {stable_mosaic.version = 11 : i64} {
  func.func @kernel(%arg0: i32, %arg1: memref<7x16x4xf32, #tpu.memory_space<vmem>>, %arg2: memref<8x8xf32, #tpu.memory_space<vmem>>, %arg3: memref<1x8xf32, #tpu.memory_space<vmem>>, %arg4: memref<16x8xf32, #tpu.memory_space<vmem>>, %arg5: memref<1x8xf32, #tpu.memory_space<vmem>>, %arg6: memref<4x8xf32, #tpu.memory_space<vmem>>, %arg7: memref<1x8xf32, #tpu.memory_space<vmem>>, %arg8: memref<16x8xf32, #tpu.memory_space<vmem>>, %arg9: memref<1x8xf32, #tpu.memory_space<vmem>>, %arg10: memref<16x8xf32, #tpu.memory_space<vmem>>, %arg11: memref<1x8xf32, #tpu.memory_space<vmem>>, %arg12: memref<8x32xf32, #tpu.memory_space<vmem>>, %arg13: memref<1x32xf32, #tpu.memory_space<vmem>>, %arg14: memref<32x32xf32, #tpu.memory_space<vmem>>, %arg15: memref<1x32xf32, #tpu.memory_space<vmem>>, %arg16: memref<32x32xf32, #tpu.memory_space<vmem>>, %arg17: memref<1x32xf32, #tpu.memory_space<vmem>>, %arg18: memref<32x128xf32, #tpu.memory_space<vmem>>, %arg19: memref<1x128xf32, #tpu.memory_space<vmem>>, %arg20: memref<7x1x128xf32, #tpu.memory_space<vmem>>) attributes {dimension_semantics = [#tpu.dimension_semantics<parallel>], iteration_bounds = array<i64: 2>, scalar_prefetch = 0 : i64, scratch_operands = 0 : i64, tpu.core_type = #tpu.core_type<tc>, window_params = [{transform_indices = @transform_0, window_bounds = array<i64: 7, 16, 4>}, {pipeline_mode = #tpu.pipeline_mode<synchronous>, transform_indices = @transform_1, window_bounds = array<i64: 8, 8>}, {pipeline_mode = #tpu.pipeline_mode<synchronous>, transform_indices = @transform_2, window_bounds = array<i64: 1, 8>}, {pipeline_mode = #tpu.pipeline_mode<synchronous>, transform_indices = @transform_3, window_bounds = array<i64: 16, 8>}, {pipeline_mode = #tpu.pipeline_mode<synchronous>, transform_indices = @transform_4, window_bounds = array<i64: 1, 8>}, {pipeline_mode = #tpu.pipeline_mode<synchronous>, transform_indices = @transform_5, window_bounds = array<i64: 4, 8>}, {pipeline_mode = #tpu.pipeline_mode<synchronous>, transform_indices = @transform_6, window_bounds = array<i64: 1, 8>}, {pipeline_mode = #tpu.pipeline_mode<synchronous>, transform_indices = @transform_7, window_bounds = array<i64: 16, 8>}, {pipeline_mode = #tpu.pipeline_mode<synchronous>, transform_indices = @transform_8, window_bounds = array<i64: 1, 8>}, {pipeline_mode = #tpu.pipeline_mode<synchronous>, transform_indices = @transform_9, window_bounds = array<i64: 16, 8>}, {pipeline_mode = #tpu.pipeline_mode<synchronous>, transform_indices = @transform_10, window_bounds = array<i64: 1, 8>}, {pipeline_mode = #tpu.pipeline_mode<synchronous>, transform_indices = @transform_11, window_bounds = array<i64: 8, 32>}, {pipeline_mode = #tpu.pipeline_mode<synchronous>, transform_indices = @transform_12, window_bounds = array<i64: 1, 32>}, {pipeline_mode = #tpu.pipeline_mode<synchronous>, transform_indices = @transform_13, window_bounds = array<i64: 32, 32>}, {pipeline_mode = #tpu.pipeline_mode<synchronous>, transform_indices = @transform_14, window_bounds = array<i64: 1, 32>}, {pipeline_mode = #tpu.pipeline_mode<synchronous>, transform_indices = @transform_15, window_bounds = array<i64: 32, 32>}, {pipeline_mode = #tpu.pipeline_mode<synchronous>, transform_indices = @transform_16, window_bounds = array<i64: 1, 32>}, {pipeline_mode = #tpu.pipeline_mode<synchronous>, transform_indices = @transform_17, window_bounds = array<i64: 32, 128>}, {pipeline_mode = #tpu.pipeline_mode<synchronous>, transform_indices = @transform_18, window_bounds = array<i64: 1, 128>}, {transform_indices = @transform_19, window_bounds = array<i64: 7, 1, 128>}]} {
    %c0 = arith.constant 0 : index
    %c0_0 = arith.constant 0 : index
    %c0_1 = arith.constant 0 : index
    %0 = vector.load %arg1[%c0, %c0_0, %c0_1] : memref<7x16x4xf32, #tpu.memory_space<vmem>>, vector<7x16x4xf32>
    %1 = vector.shape_cast %0 : vector<7x16x4xf32> to vector<112x4xf32>
    %2 = tpu.iota {dimensions = array<i32: 0>} : vector<112x1xi32>
    %c16_i32 = arith.constant 16 : i32
    %c0_i32 = arith.constant 0 : i32
    %3 = arith.cmpi eq, %c16_i32, %c0_i32 : i32
    %c1_i32 = arith.constant 1 : i32
    %4 = arith.select %3, %c1_i32, %c16_i32 : i32
    %5 = vector.broadcast %4 : i32 to vector<112x1xi32>
    %6 = arith.remsi %2, %5 : vector<112x1xi32>
    %c0_i32_2 = arith.constant 0 : i32
    %7 = vector.broadcast %c0_i32_2 : i32 to vector<112x1xi32>
    %8 = arith.cmpi ne, %6, %7 : vector<112x1xi32>
    %c0_i32_3 = arith.constant 0 : i32
    %9 = vector.broadcast %c0_i32_3 : i32 to vector<112x1xi32>
    %10 = arith.cmpi slt, %6, %9 : vector<112x1xi32>
    %c0_i32_4 = arith.constant 0 : i32
    %11 = arith.cmpi slt, %4, %c0_i32_4 : i32
    %12 = vector.broadcast %11 : i1 to vector<112x1xi1>
    %13 = vector.broadcast %12 : vector<112x1xi1> to vector<112x1xi1>
    %14 = arith.xori %10, %13 : vector<112x1xi1>
    %15 = arith.andi %14, %8 : vector<112x1xi1>
    %16 = vector.broadcast %4 : i32 to vector<112x1xi32>
    %17 = arith.addi %6, %16 : vector<112x1xi32>
    %18 = arith.select %15, %17, %6 : vector<112x1xi1>, vector<112x1xi32>
    %c1_i32_5 = arith.constant 1 : i32
    %19 = tpu.dynamic_rotate %1 by %c1_i32_5 dim 0 : vector<112x4xf32>, i32 -> vector<112x4xf32>
    %c1_i32_6 = arith.constant 1 : i32
    %20 = vector.broadcast %c1_i32_6 : i32 to vector<112x1xi32>
    %21 = arith.cmpi sge, %18, %20 : vector<112x1xi32>
    %cst = arith.constant 0.000000e+00 : f32
    %22 = vector.shape_cast %21 : vector<112x1xi1> to vector<112x1xi1>
    %23 = vector.broadcast %22 : vector<112x1xi1> to vector<112x4xi1>
    %24 = vector.broadcast %cst : f32 to vector<112x4xf32>
    %25 = arith.select %23, %19, %24 : vector<112x4xi1>, vector<112x4xf32>
    %26 = tpu.concatenate %25, %1 in 1 : vector<112x4xf32>, vector<112x4xf32> -> vector<112x8xf32>
    %c0_7 = arith.constant 0 : index
    %c0_8 = arith.constant 0 : index
    %27 = vector.load %arg2[%c0_7, %c0_8] : memref<8x8xf32, #tpu.memory_space<vmem>>, vector<8x8xf32>
    %cst_9 = arith.constant dense<0.000000e+00> : vector<112x8xf32>
    %28 = tpu.matmul %26, %27, %cst_9 {dimension_numbers = #tpu.dot_dimension_numbers<[1], [0], [0], [1], [0, 0, 1, 1], [], []>} : vector<112x8xf32>, vector<8x8xf32>, vector<112x8xf32> -> vector<112x8xf32>
    %c0_10 = arith.constant 0 : index
    %c0_11 = arith.constant 0 : index
    %29 = vector.load %arg3[%c0_10, %c0_11] : memref<1x8xf32, #tpu.memory_space<vmem>>, vector<1x8xf32>
    %30 = vector.broadcast %29 : vector<1x8xf32> to vector<112x8xf32>
    %31 = arith.addf %28, %30 : vector<112x8xf32>
    %cst_12 = arith.constant 0.000000e+00 : f32
    %32 = vector.broadcast %cst_12 : f32 to vector<112x8xf32>
    %33 = arith.maximumf %31, %32 : vector<112x8xf32>
    %c1_i32_13 = arith.constant 1 : i32
    %34 = tpu.dynamic_rotate %33 by %c1_i32_13 dim 0 : vector<112x8xf32>, i32 -> vector<112x8xf32>
    %c1_i32_14 = arith.constant 1 : i32
    %35 = vector.broadcast %c1_i32_14 : i32 to vector<112x1xi32>
    %36 = arith.cmpi sge, %18, %35 : vector<112x1xi32>
    %cst_15 = arith.constant 0.000000e+00 : f32
    %37 = vector.shape_cast %36 : vector<112x1xi1> to vector<112x1xi1>
    %38 = vector.broadcast %37 : vector<112x1xi1> to vector<112x8xi1>
    %39 = vector.broadcast %cst_15 : f32 to vector<112x8xf32>
    %40 = arith.select %38, %34, %39 : vector<112x8xi1>, vector<112x8xf32>
    %41 = tpu.concatenate %40, %33 in 1 : vector<112x8xf32>, vector<112x8xf32> -> vector<112x16xf32>
    %c0_16 = arith.constant 0 : index
    %c0_17 = arith.constant 0 : index
    %42 = vector.load %arg4[%c0_16, %c0_17] : memref<16x8xf32, #tpu.memory_space<vmem>>, vector<16x8xf32>
    %cst_18 = arith.constant dense<0.000000e+00> : vector<112x8xf32>
    %43 = tpu.matmul %41, %42, %cst_18 {dimension_numbers = #tpu.dot_dimension_numbers<[1], [0], [0], [1], [0, 0, 1, 1], [], []>} : vector<112x16xf32>, vector<16x8xf32>, vector<112x8xf32> -> vector<112x8xf32>
    %c0_19 = arith.constant 0 : index
    %c0_20 = arith.constant 0 : index
    %44 = vector.load %arg5[%c0_19, %c0_20] : memref<1x8xf32, #tpu.memory_space<vmem>>, vector<1x8xf32>
    %45 = vector.broadcast %44 : vector<1x8xf32> to vector<112x8xf32>
    %46 = arith.addf %43, %45 : vector<112x8xf32>
    %cst_21 = arith.constant 0.000000e+00 : f32
    %47 = vector.broadcast %cst_21 : f32 to vector<112x8xf32>
    %48 = arith.maximumf %46, %47 : vector<112x8xf32>
    %c0_22 = arith.constant 0 : index
    %c0_23 = arith.constant 0 : index
    %49 = vector.load %arg6[%c0_22, %c0_23] : memref<4x8xf32, #tpu.memory_space<vmem>>, vector<4x8xf32>
    %cst_24 = arith.constant dense<0.000000e+00> : vector<112x8xf32>
    %50 = tpu.matmul %1, %49, %cst_24 {dimension_numbers = #tpu.dot_dimension_numbers<[1], [0], [0], [1], [0, 0, 1, 1], [], []>} : vector<112x4xf32>, vector<4x8xf32>, vector<112x8xf32> -> vector<112x8xf32>
    %c0_25 = arith.constant 0 : index
    %c0_26 = arith.constant 0 : index
    %51 = vector.load %arg7[%c0_25, %c0_26] : memref<1x8xf32, #tpu.memory_space<vmem>>, vector<1x8xf32>
    %52 = vector.broadcast %51 : vector<1x8xf32> to vector<112x8xf32>
    %53 = arith.addf %50, %52 : vector<112x8xf32>
    %54 = arith.addf %48, %53 : vector<112x8xf32>
    %cst_27 = arith.constant 0.000000e+00 : f32
    %55 = vector.broadcast %cst_27 : f32 to vector<112x8xf32>
    %56 = arith.maximumf %54, %55 : vector<112x8xf32>
    %c2_i32 = arith.constant 2 : i32
    %57 = tpu.dynamic_rotate %56 by %c2_i32 dim 0 : vector<112x8xf32>, i32 -> vector<112x8xf32>
    %c2_i32_28 = arith.constant 2 : i32
    %58 = vector.broadcast %c2_i32_28 : i32 to vector<112x1xi32>
    %59 = arith.cmpi sge, %18, %58 : vector<112x1xi32>
    %cst_29 = arith.constant 0.000000e+00 : f32
    %60 = vector.shape_cast %59 : vector<112x1xi1> to vector<112x1xi1>
    %61 = vector.broadcast %60 : vector<112x1xi1> to vector<112x8xi1>
    %62 = vector.broadcast %cst_29 : f32 to vector<112x8xf32>
    %63 = arith.select %61, %57, %62 : vector<112x8xi1>, vector<112x8xf32>
    %64 = tpu.concatenate %63, %56 in 1 : vector<112x8xf32>, vector<112x8xf32> -> vector<112x16xf32>
    %c0_30 = arith.constant 0 : index
    %c0_31 = arith.constant 0 : index
    %65 = vector.load %arg8[%c0_30, %c0_31] : memref<16x8xf32, #tpu.memory_space<vmem>>, vector<16x8xf32>
    %cst_32 = arith.constant dense<0.000000e+00> : vector<112x8xf32>
    %66 = tpu.matmul %64, %65, %cst_32 {dimension_numbers = #tpu.dot_dimension_numbers<[1], [0], [0], [1], [0, 0, 1, 1], [], []>} : vector<112x16xf32>, vector<16x8xf32>, vector<112x8xf32> -> vector<112x8xf32>
    %c0_33 = arith.constant 0 : index
    %c0_34 = arith.constant 0 : index
    %67 = vector.load %arg9[%c0_33, %c0_34] : memref<1x8xf32, #tpu.memory_space<vmem>>, vector<1x8xf32>
    %68 = vector.broadcast %67 : vector<1x8xf32> to vector<112x8xf32>
    %69 = arith.addf %66, %68 : vector<112x8xf32>
    %cst_35 = arith.constant 0.000000e+00 : f32
    %70 = vector.broadcast %cst_35 : f32 to vector<112x8xf32>
    %71 = arith.maximumf %69, %70 : vector<112x8xf32>
    %c2_i32_36 = arith.constant 2 : i32
    %72 = tpu.dynamic_rotate %71 by %c2_i32_36 dim 0 : vector<112x8xf32>, i32 -> vector<112x8xf32>
    %c2_i32_37 = arith.constant 2 : i32
    %73 = vector.broadcast %c2_i32_37 : i32 to vector<112x1xi32>
    %74 = arith.cmpi sge, %18, %73 : vector<112x1xi32>
    %cst_38 = arith.constant 0.000000e+00 : f32
    %75 = vector.shape_cast %74 : vector<112x1xi1> to vector<112x1xi1>
    %76 = vector.broadcast %75 : vector<112x1xi1> to vector<112x8xi1>
    %77 = vector.broadcast %cst_38 : f32 to vector<112x8xf32>
    %78 = arith.select %76, %72, %77 : vector<112x8xi1>, vector<112x8xf32>
    %79 = tpu.concatenate %78, %71 in 1 : vector<112x8xf32>, vector<112x8xf32> -> vector<112x16xf32>
    %c0_39 = arith.constant 0 : index
    %c0_40 = arith.constant 0 : index
    %80 = vector.load %arg10[%c0_39, %c0_40] : memref<16x8xf32, #tpu.memory_space<vmem>>, vector<16x8xf32>
    %cst_41 = arith.constant dense<0.000000e+00> : vector<112x8xf32>
    %81 = tpu.matmul %79, %80, %cst_41 {dimension_numbers = #tpu.dot_dimension_numbers<[1], [0], [0], [1], [0, 0, 1, 1], [], []>} : vector<112x16xf32>, vector<16x8xf32>, vector<112x8xf32> -> vector<112x8xf32>
    %c0_42 = arith.constant 0 : index
    %c0_43 = arith.constant 0 : index
    %82 = vector.load %arg11[%c0_42, %c0_43] : memref<1x8xf32, #tpu.memory_space<vmem>>, vector<1x8xf32>
    %83 = vector.broadcast %82 : vector<1x8xf32> to vector<112x8xf32>
    %84 = arith.addf %81, %83 : vector<112x8xf32>
    %cst_44 = arith.constant 0.000000e+00 : f32
    %85 = vector.broadcast %cst_44 : f32 to vector<112x8xf32>
    %86 = arith.maximumf %84, %85 : vector<112x8xf32>
    %87 = arith.addf %86, %56 : vector<112x8xf32>
    %cst_45 = arith.constant 0.000000e+00 : f32
    %88 = vector.broadcast %cst_45 : f32 to vector<112x8xf32>
    %89 = arith.maximumf %87, %88 : vector<112x8xf32>
    %90 = vector.shape_cast %89 : vector<112x8xf32> to vector<7x16x8xf32>
    %91 = vector.extract_strided_slice %90 {offsets = [0, 15, 0], sizes = [7, 1, 8], strides = [1, 1, 1]} : vector<7x16x8xf32> to vector<7x1x8xf32>
    %92 = vector.shape_cast %91 : vector<7x1x8xf32> to vector<7x8xf32>
    %c0_46 = arith.constant 0 : index
    %c0_47 = arith.constant 0 : index
    %93 = vector.load %arg12[%c0_46, %c0_47] : memref<8x32xf32, #tpu.memory_space<vmem>>, vector<8x32xf32>
    %cst_48 = arith.constant dense<0.000000e+00> : vector<7x32xf32>
    %94 = tpu.matmul %92, %93, %cst_48 {dimension_numbers = #tpu.dot_dimension_numbers<[1], [0], [0], [1], [0, 0, 1, 1], [], []>} : vector<7x8xf32>, vector<8x32xf32>, vector<7x32xf32> -> vector<7x32xf32>
    %c0_49 = arith.constant 0 : index
    %c0_50 = arith.constant 0 : index
    %95 = vector.load %arg13[%c0_49, %c0_50] : memref<1x32xf32, #tpu.memory_space<vmem>>, vector<1x32xf32>
    %96 = vector.broadcast %95 : vector<1x32xf32> to vector<7x32xf32>
    %97 = arith.addf %94, %96 : vector<7x32xf32>
    %cst_51 = arith.constant 0.000000e+00 : f32
    %98 = vector.broadcast %cst_51 : f32 to vector<7x32xf32>
    %99 = arith.maximumf %97, %98 : vector<7x32xf32>
    %c0_52 = arith.constant 0 : index
    %c0_53 = arith.constant 0 : index
    %100 = vector.load %arg14[%c0_52, %c0_53] : memref<32x32xf32, #tpu.memory_space<vmem>>, vector<32x32xf32>
    %cst_54 = arith.constant dense<0.000000e+00> : vector<7x32xf32>
    %101 = tpu.matmul %99, %100, %cst_54 {dimension_numbers = #tpu.dot_dimension_numbers<[1], [0], [0], [1], [0, 0, 1, 1], [], []>} : vector<7x32xf32>, vector<32x32xf32>, vector<7x32xf32> -> vector<7x32xf32>
    %c0_55 = arith.constant 0 : index
    %c0_56 = arith.constant 0 : index
    %102 = vector.load %arg15[%c0_55, %c0_56] : memref<1x32xf32, #tpu.memory_space<vmem>>, vector<1x32xf32>
    %103 = vector.broadcast %102 : vector<1x32xf32> to vector<7x32xf32>
    %104 = arith.addf %101, %103 : vector<7x32xf32>
    %cst_57 = arith.constant 0.000000e+00 : f32
    %105 = vector.broadcast %cst_57 : f32 to vector<7x32xf32>
    %106 = arith.maximumf %104, %105 : vector<7x32xf32>
    %c0_58 = arith.constant 0 : index
    %c0_59 = arith.constant 0 : index
    %107 = vector.load %arg16[%c0_58, %c0_59] : memref<32x32xf32, #tpu.memory_space<vmem>>, vector<32x32xf32>
    %cst_60 = arith.constant dense<0.000000e+00> : vector<7x32xf32>
    %108 = tpu.matmul %106, %107, %cst_60 {dimension_numbers = #tpu.dot_dimension_numbers<[1], [0], [0], [1], [0, 0, 1, 1], [], []>} : vector<7x32xf32>, vector<32x32xf32>, vector<7x32xf32> -> vector<7x32xf32>
    %c0_61 = arith.constant 0 : index
    %c0_62 = arith.constant 0 : index
    %109 = vector.load %arg17[%c0_61, %c0_62] : memref<1x32xf32, #tpu.memory_space<vmem>>, vector<1x32xf32>
    %110 = vector.broadcast %109 : vector<1x32xf32> to vector<7x32xf32>
    %111 = arith.addf %108, %110 : vector<7x32xf32>
    %cst_63 = arith.constant 0.000000e+00 : f32
    %112 = vector.broadcast %cst_63 : f32 to vector<7x32xf32>
    %113 = arith.maximumf %111, %112 : vector<7x32xf32>
    %c0_64 = arith.constant 0 : index
    %c0_65 = arith.constant 0 : index
    %114 = vector.load %arg18[%c0_64, %c0_65] : memref<32x128xf32, #tpu.memory_space<vmem>>, vector<32x128xf32>
    %cst_66 = arith.constant dense<0.000000e+00> : vector<7x128xf32>
    %115 = tpu.matmul %113, %114, %cst_66 {dimension_numbers = #tpu.dot_dimension_numbers<[1], [0], [0], [1], [0, 0, 1, 1], [], []>} : vector<7x32xf32>, vector<32x128xf32>, vector<7x128xf32> -> vector<7x128xf32>
    %c0_67 = arith.constant 0 : index
    %c0_68 = arith.constant 0 : index
    %116 = vector.load %arg19[%c0_67, %c0_68] : memref<1x128xf32, #tpu.memory_space<vmem>>, vector<1x128xf32>
    %117 = vector.broadcast %116 : vector<1x128xf32> to vector<7x128xf32>
    %118 = arith.addf %115, %117 : vector<7x128xf32>
    %c0_69 = arith.constant 0 : index
    %c0_70 = arith.constant 0 : index
    %c0_71 = arith.constant 0 : index
    %119 = vector.load %arg20[%c0_69, %c0_70, %c0_71] : memref<7x1x128xf32, #tpu.memory_space<vmem>>, vector<7x1x128xf32>
    %120 = vector.shape_cast %119 : vector<7x1x128xf32> to vector<7x128xf32>
    %121 = vector.shape_cast %118 : vector<7x128xf32> to vector<7x1x128xf32>
    tpu.vector_store %arg20[%c0_69, %c0_70, %c0_71], %121 {strides = array<i32>} : memref<7x1x128xf32, #tpu.memory_space<vmem>>, vector<7x1x128xf32>,
    return
  }
  func.func @transform_0(%arg0: i32) -> (i32, i32, i32) {
    %c0_i32 = arith.constant 0 : i32
    %c0_i32_0 = arith.constant 0 : i32
    %c0_i32_1 = arith.constant 0 : i32
    return %arg0, %c0_i32, %c0_i32_0 : i32, i32, i32
  }
  func.func @transform_1(%arg0: i32) -> (i32, i32) {
    %c0_i32 = arith.constant 0 : i32
    %c0_i32_0 = arith.constant 0 : i32
    %c0_i32_1 = arith.constant 0 : i32
    return %c0_i32, %c0_i32_0 : i32, i32
  }
  func.func @transform_2(%arg0: i32) -> (i32, i32) {
    %c0_i32 = arith.constant 0 : i32
    %c0_i32_0 = arith.constant 0 : i32
    %c0_i32_1 = arith.constant 0 : i32
    return %c0_i32, %c0_i32_0 : i32, i32
  }
  func.func @transform_3(%arg0: i32) -> (i32, i32) {
    %c0_i32 = arith.constant 0 : i32
    %c0_i32_0 = arith.constant 0 : i32
    %c0_i32_1 = arith.constant 0 : i32
    return %c0_i32, %c0_i32_0 : i32, i32
  }
  func.func @transform_4(%arg0: i32) -> (i32, i32) {
    %c0_i32 = arith.constant 0 : i32
    %c0_i32_0 = arith.constant 0 : i32
    %c0_i32_1 = arith.constant 0 : i32
    return %c0_i32, %c0_i32_0 : i32, i32
  }
  func.func @transform_5(%arg0: i32) -> (i32, i32) {
    %c0_i32 = arith.constant 0 : i32
    %c0_i32_0 = arith.constant 0 : i32
    %c0_i32_1 = arith.constant 0 : i32
    return %c0_i32, %c0_i32_0 : i32, i32
  }
  func.func @transform_6(%arg0: i32) -> (i32, i32) {
    %c0_i32 = arith.constant 0 : i32
    %c0_i32_0 = arith.constant 0 : i32
    %c0_i32_1 = arith.constant 0 : i32
    return %c0_i32, %c0_i32_0 : i32, i32
  }
  func.func @transform_7(%arg0: i32) -> (i32, i32) {
    %c0_i32 = arith.constant 0 : i32
    %c0_i32_0 = arith.constant 0 : i32
    %c0_i32_1 = arith.constant 0 : i32
    return %c0_i32, %c0_i32_0 : i32, i32
  }
  func.func @transform_8(%arg0: i32) -> (i32, i32) {
    %c0_i32 = arith.constant 0 : i32
    %c0_i32_0 = arith.constant 0 : i32
    %c0_i32_1 = arith.constant 0 : i32
    return %c0_i32, %c0_i32_0 : i32, i32
  }
  func.func @transform_9(%arg0: i32) -> (i32, i32) {
    %c0_i32 = arith.constant 0 : i32
    %c0_i32_0 = arith.constant 0 : i32
    %c0_i32_1 = arith.constant 0 : i32
    return %c0_i32, %c0_i32_0 : i32, i32
  }
  func.func @transform_10(%arg0: i32) -> (i32, i32) {
    %c0_i32 = arith.constant 0 : i32
    %c0_i32_0 = arith.constant 0 : i32
    %c0_i32_1 = arith.constant 0 : i32
    return %c0_i32, %c0_i32_0 : i32, i32
  }
  func.func @transform_11(%arg0: i32) -> (i32, i32) {
    %c0_i32 = arith.constant 0 : i32
    %c0_i32_0 = arith.constant 0 : i32
    %c0_i32_1 = arith.constant 0 : i32
    return %c0_i32, %c0_i32_0 : i32, i32
  }
  func.func @transform_12(%arg0: i32) -> (i32, i32) {
    %c0_i32 = arith.constant 0 : i32
    %c0_i32_0 = arith.constant 0 : i32
    %c0_i32_1 = arith.constant 0 : i32
    return %c0_i32, %c0_i32_0 : i32, i32
  }
  func.func @transform_13(%arg0: i32) -> (i32, i32) {
    %c0_i32 = arith.constant 0 : i32
    %c0_i32_0 = arith.constant 0 : i32
    %c0_i32_1 = arith.constant 0 : i32
    return %c0_i32, %c0_i32_0 : i32, i32
  }
  func.func @transform_14(%arg0: i32) -> (i32, i32) {
    %c0_i32 = arith.constant 0 : i32
    %c0_i32_0 = arith.constant 0 : i32
    %c0_i32_1 = arith.constant 0 : i32
    return %c0_i32, %c0_i32_0 : i32, i32
  }
  func.func @transform_15(%arg0: i32) -> (i32, i32) {
    %c0_i32 = arith.constant 0 : i32
    %c0_i32_0 = arith.constant 0 : i32
    %c0_i32_1 = arith.constant 0 : i32
    return %c0_i32, %c0_i32_0 : i32, i32
  }
  func.func @transform_16(%arg0: i32) -> (i32, i32) {
    %c0_i32 = arith.constant 0 : i32
    %c0_i32_0 = arith.constant 0 : i32
    %c0_i32_1 = arith.constant 0 : i32
    return %c0_i32, %c0_i32_0 : i32, i32
  }
  func.func @transform_17(%arg0: i32) -> (i32, i32) {
    %c0_i32 = arith.constant 0 : i32
    %c0_i32_0 = arith.constant 0 : i32
    %c0_i32_1 = arith.constant 0 : i32
    return %c0_i32, %c0_i32_0 : i32, i32
  }
  func.func @transform_18(%arg0: i32) -> (i32, i32) {
    %c0_i32 = arith.constant 0 : i32
    %c0_i32_0 = arith.constant 0 : i32
    %c0_i32_1 = arith.constant 0 : i32
    return %c0_i32, %c0_i32_0 : i32, i32
  }
  func.func @transform_19(%arg0: i32) -> (i32, i32, i32) {
    %c0_i32 = arith.constant 0 : i32
    %c0_i32_0 = arith.constant 0 : i32
    %c0_i32_1 = arith.constant 0 : i32
    return %arg0, %c0_i32, %c0_i32_0 : i32, i32, i32
  }
}

</mosaic_0001>

<llo_original>
// kernel: tpu_custom_call.1
$region0: #{tpu_custom_call.1}
  #allocation0 [shape = 'u32[]', space=smem, size = 0x4, offset = 0x4, fixed_abs, tag = 'smem constant byte address 0x4 - core index']
  #allocation1 [shape = 'u32[144,128]{1,0:T(1,128)}', space=vmem, size = 0x12000, scoped, tag = 'internal scratch']
  %s0 = inlined_call_operand.vmem [shape: f32[14,16,4], index: 0, kind: input, shape index: {}]
  %s1 = inlined_call_operand.vmem [shape: f32[8,8], index: 1, kind: input, shape index: {}]
  %s2 = inlined_call_operand.vmem [shape: f32[1,8], index: 2, kind: input, shape index: {}]
  %s3 = inlined_call_operand.vmem [shape: f32[16,8], index: 3, kind: input, shape index: {}]
  %s4 = inlined_call_operand.vmem [shape: f32[1,8], index: 4, kind: input, shape index: {}]
  %s5 = inlined_call_operand.vmem [shape: f32[4,8], index: 5, kind: input, shape index: {}]
  %s6 = inlined_call_operand.vmem [shape: f32[1,8], index: 6, kind: input, shape index: {}]
  %s7 = inlined_call_operand.vmem [shape: f32[16,8], index: 7, kind: input, shape index: {}]
  %s8 = inlined_call_operand.vmem [shape: f32[1,8], index: 8, kind: input, shape index: {}]
  %s9 = inlined_call_operand.vmem [shape: f32[16,8], index: 9, kind: input, shape index: {}]
  %s10 = inlined_call_operand.vmem [shape: f32[1,8], index: 10, kind: input, shape index: {}]
  %s11 = inlined_call_operand.vmem [shape: f32[8,32], index: 11, kind: input, shape index: {}]
  %s12 = inlined_call_operand.vmem [shape: f32[1,32], index: 12, kind: input, shape index: {}]
  %s13 = inlined_call_operand.vmem [shape: f32[32,32], index: 13, kind: input, shape index: {}]
  %s14 = inlined_call_operand.vmem [shape: f32[1,32], index: 14, kind: input, shape index: {}]
  %s15 = inlined_call_operand.vmem [shape: f32[32,32], index: 15, kind: input, shape index: {}]
  %s16 = inlined_call_operand.vmem [shape: f32[1,32], index: 16, kind: input, shape index: {}]
  %s17 = inlined_call_operand.vmem [shape: f32[32,128], index: 17, kind: input, shape index: {}]
  %s18 = inlined_call_operand.vmem [shape: f32[1,128], index: 18, kind: input, shape index: {}]
  %s19 = inlined_call_operand.hbm [shape: f32[14,1,128], index: 19, kind: output, shape index: {}]
  %s20 = sld [smem:[#allocation0]]
  $region109: #{tpu_custom_call.1} parent=0
    _
  %s22 = ssub.s32 1, %s20
  %s23 = scalar_select 0, %s22, %s20
  $region1: #{tpu_custom_call.1} parent=0
    #allocation2 [shape = 'u8[7168]{0}', space=vmem, size = 0x1c00, scoped, tag = 'output window, operand 0']
    #allocation3 [shape = 's32[2]{0}', space=sflag, size = 0x8, scoped, tag = 'scoped memory for tpu_custom_call.1']
    %24 = vsyncpa [#allocation3], 0
    %s25 = scalar_lea.sflag [#allocation3], 1
    %26 = vsyncpa %s25, 0
    loop: start=0, step=1, limit=4
    $region2: #{tpu_custom_call.1} parent=1 // loop_pre_header
      _
    $region3: #{tpu_custom_call.1} parent=1 // loop_header
      %s28 = sphi 0, %s32
      %p29 = scmp.ge.s32.totalorder %s28, 4
      %s38 = sphi 0, %s40
      %s41 = sphi 0, %s38
      %s42 = sphi 0, %s41
      %s58 = sphi 0, %s42
      %s62 = sphi 0, %s62
      %s64 = sphi 0, %s62
      %s65 = sphi 0, %s64
      %s79 = sphi 0, %s65
      %s83 = sphi 0, %s83
      %s85 = sphi 0, %s83
      %s86 = sphi 0, %s85
      %s100 = sphi 0, %s86
      %s104 = sphi 0, %s104
      %s106 = sphi 0, %s104
      %s107 = sphi 0, %s106
      %s121 = sphi 0, %s107
      %s125 = sphi 0, %s125
      %s127 = sphi 0, %s125
      %s128 = sphi 0, %s127
      %s142 = sphi 0, %s128
      %s146 = sphi 0, %s146
      %s148 = sphi 0, %s146
      %s149 = sphi 0, %s148
      %s163 = sphi 0, %s149
      %s167 = sphi 0, %s167
      %s169 = sphi 0, %s167
      %s170 = sphi 0, %s169
      %s184 = sphi 0, %s170
      %s188 = sphi 0, %s188
      %s190 = sphi 0, %s188
      %s191 = sphi 0, %s190
      %s205 = sphi 0, %s191
      %s209 = sphi 0, %s209
      %s211 = sphi 0, %s209
      %s212 = sphi 0, %s211
      %s226 = sphi 0, %s212
      %s230 = sphi 0, %s230
      %s232 = sphi 0, %s230
      %s233 = sphi 0, %s232
      %s247 = sphi 0, %s233
      %s251 = sphi 0, %s251
      %s253 = sphi 0, %s251
      %s254 = sphi 0, %s253
      %s268 = sphi 0, %s254
      %s272 = sphi 0, %s272
      %s274 = sphi 0, %s272
      %s275 = sphi 0, %s274
      %s289 = sphi 0, %s275
      %s293 = sphi 0, %s293
      %s295 = sphi 0, %s293
      %s296 = sphi 0, %s295
      %s310 = sphi 0, %s296
      %s314 = sphi 0, %s314
      %s316 = sphi 0, %s314
      %s317 = sphi 0, %s316
      %s331 = sphi 0, %s317
      %s335 = sphi 0, %s335
      %s337 = sphi 0, %s335
      %s338 = sphi 0, %s337
      %s352 = sphi 0, %s338
      %s356 = sphi 0, %s356
      %s358 = sphi 0, %s356
      %s359 = sphi 0, %s358
      %s373 = sphi 0, %s359
      %s377 = sphi 0, %s377
      %s379 = sphi 0, %s377
      %s380 = sphi 0, %s379
      %s394 = sphi 0, %s380
      %s398 = sphi 0, %s398
      %s400 = sphi 0, %s398
      %s401 = sphi 0, %s400
      %s415 = sphi 0, %s401
      %s419 = sphi 0, %s419
      %s421 = sphi 0, %s419
      %s422 = sphi 0, %s421
      %s436 = sphi 0, %s422
      %s442 = sphi 0, %s444
      %s445 = sphi 0, %s442
      %s446 = sphi 0, %s445
      %s462 = sphi 0, %s446
    $region4: #{tpu_custom_call.1} parent=1 // loop_header_branch
      %31 = sbr.rel (%p29) target = $region8
    $region5: #{tpu_custom_call.1} parent=1 // loop_body
      %s33 = ssub.s32 %s28, 1
      %s34 = ssub.s32 %s28, 2
      %s35 = sadd.s32 %s28, 1
      %s36 = ssub.s32 %s28, %s35
      %p37 = scmp.eq.s32.totalorder %s36, 0
      %s39 = sadd.s32 %s38, 1
      %s40 = scalar_select %p37, %s38, %s39
      %p43 = pneg %p37
      %p44 = scmp.eq.s32.totalorder %s28, 1
      %p45 = por %p43, %p44
      %p46 = scmp.ne.s32.totalorder %s38, %s41
      %p47 = scmp.eq.s32.totalorder %s28, 0
      %p48 = por %p46, %p47
      %p49 = scmp.ne.s32.totalorder %s38, %s41
      %p50 = scmp.eq.s32.totalorder %s33, 1
      %p51 = por %p49, %p50
      %p52 = scmp.ne.s32.totalorder %s41, %s42
      %p53 = scmp.eq.s32.totalorder %s33, 0
      %p54 = por %p52, %p53
      %p55 = scmp.ne.s32.totalorder %s41, %s42
      %p56 = scmp.eq.s32.totalorder %s34, 1
      %p57 = por %p55, %p56
      %p59 = scmp.ne.s32.totalorder %s42, %s58
      %p60 = scmp.eq.s32.totalorder %s34, 0
      %p61 = por %p59, %p60
      %s63 = sadd.s32 %s62, 1
      %p66 = scmp.eq.s32.totalorder %s28, 1
      %p67 = scmp.ne.s32.totalorder %s62, %s64
      %p68 = scmp.eq.s32.totalorder %s28, 0
      %p69 = por %p67, %p68
      %p70 = scmp.ne.s32.totalorder %s62, %s64
      %p71 = scmp.eq.s32.totalorder %s33, 1
      %p72 = por %p70, %p71
      %p73 = scmp.ne.s32.totalorder %s64, %s65
      %p74 = scmp.eq.s32.totalorder %s33, 0
      %p75 = por %p73, %p74
      %p76 = scmp.ne.s32.totalorder %s64, %s65
      %p77 = scmp.eq.s32.totalorder %s34, 1
      %p78 = por %p76, %p77
      %p80 = scmp.ne.s32.totalorder %s65, %s79
      %p81 = scmp.eq.s32.totalorder %s34, 0
      %p82 = por %p80, %p81
      %s84 = sadd.s32 %s83, 1
      %p87 = scmp.eq.s32.totalorder %s28, 1
      %p88 = scmp.ne.s32.totalorder %s83, %s85
      %p89 = scmp.eq.s32.totalorder %s28, 0
      %p90 = por %p88, %p89
      %p91 = scmp.ne.s32.totalorder %s83, %s85
      %p92 = scmp.eq.s32.totalorder %s33, 1
      %p93 = por %p91, %p92
      %p94 = scmp.ne.s32.totalorder %s85, %s86
      %p95 = scmp.eq.s32.totalorder %s33, 0
      %p96 = por %p94, %p95
      %p97 = scmp.ne.s32.totalorder %s85, %s86
      %p98 = scmp.eq.s32.totalorder %s34, 1
      %p99 = por %p97, %p98
      %p101 = scmp.ne.s32.totalorder %s86, %s100
      %p102 = scmp.eq.s32.totalorder %s34, 0
      %p103 = por %p101, %p102
      %s105 = sadd.s32 %s104, 1
      %p108 = scmp.eq.s32.totalorder %s28, 1
      %p109 = scmp.ne.s32.totalorder %s104, %s106
      %p110 = scmp.eq.s32.totalorder %s28, 0
      %p111 = por %p109, %p110
      %p112 = scmp.ne.s32.totalorder %s104, %s106
      %p113 = scmp.eq.s32.totalorder %s33, 1
      %p114 = por %p112, %p113
      %p115 = scmp.ne.s32.totalorder %s106, %s107
      %p116 = scmp.eq.s32.totalorder %s33, 0
      %p117 = por %p115, %p116
      %p118 = scmp.ne.s32.totalorder %s106, %s107
      %p119 = scmp.eq.s32.totalorder %s34, 1
      %p120 = por %p118, %p119
      %p122 = scmp.ne.s32.totalorder %s107, %s121
      %p123 = scmp.eq.s32.totalorder %s34, 0
      %p124 = por %p122, %p123
      %s126 = sadd.s32 %s125, 1
      %p129 = scmp.eq.s32.totalorder %s28, 1
      %p130 = scmp.ne.s32.totalorder %s125, %s127
      %p131 = scmp.eq.s32.totalorder %s28, 0
      %p132 = por %p130, %p131
      %p133 = scmp.ne.s32.totalorder %s125, %s127
      %p134 = scmp.eq.s32.totalorder %s33, 1
      %p135 = por %p133, %p134
      %p136 = scmp.ne.s32.totalorder %s127, %s128
      %p137 = scmp.eq.s32.totalorder %s33, 0
      %p138 = por %p136, %p137
      %p139 = scmp.ne.s32.totalorder %s127, %s128
      %p140 = scmp.eq.s32.totalorder %s34, 1
      %p141 = por %p139, %p140
      %p143 = scmp.ne.s32.totalorder %s128, %s142
      %p144 = scmp.eq.s32.totalorder %s34, 0
      %p145 = por %p143, %p144
      %s147 = sadd.s32 %s146, 1
      %p150 = scmp.eq.s32.totalorder %s28, 1
      %p151 = scmp.ne.s32.totalorder %s146, %s148
      %p152 = scmp.eq.s32.totalorder %s28, 0
      %p153 = por %p151, %p152
      %p154 = scmp.ne.s32.totalorder %s146, %s148
      %p155 = scmp.eq.s32.totalorder %s33, 1
      %p156 = por %p154, %p155
      %p157 = scmp.ne.s32.totalorder %s148, %s149
      %p158 = scmp.eq.s32.totalorder %s33, 0
      %p159 = por %p157, %p158
      %p160 = scmp.ne.s32.totalorder %s148, %s149
      %p161 = scmp.eq.s32.totalorder %s34, 1
      %p162 = por %p160, %p161
      %p164 = scmp.ne.s32.totalorder %s149, %s163
      %p165 = scmp.eq.s32.totalorder %s34, 0
      %p166 = por %p164, %p165
      %s168 = sadd.s32 %s167, 1
      %p171 = scmp.eq.s32.totalorder %s28, 1
      %p172 = scmp.ne.s32.totalorder %s167, %s169
      %p173 = scmp.eq.s32.totalorder %s28, 0
      %p174 = por %p172, %p173
      %p175 = scmp.ne.s32.totalorder %s167, %s169
      %p176 = scmp.eq.s32.totalorder %s33, 1
      %p177 = por %p175, %p176
      %p178 = scmp.ne.s32.totalorder %s169, %s170
      %p179 = scmp.eq.s32.totalorder %s33, 0
      %p180 = por %p178, %p179
      %p181 = scmp.ne.s32.totalorder %s169, %s170
      %p182 = scmp.eq.s32.totalorder %s34, 1
      %p183 = por %p181, %p182
      %p185 = scmp.ne.s32.totalorder %s170, %s184
      %p186 = scmp.eq.s32.totalorder %s34, 0
      %p187 = por %p185, %p186
      %s189 = sadd.s32 %s188, 1
      %p192 = scmp.eq.s32.totalorder %s28, 1
      %p193 = scmp.ne.s32.totalorder %s188, %s190
      %p194 = scmp.eq.s32.totalorder %s28, 0
      %p195 = por %p193, %p194
      %p196 = scmp.ne.s32.totalorder %s188, %s190
      %p197 = scmp.eq.s32.totalorder %s33, 1
      %p198 = por %p196, %p197
      %p199 = scmp.ne.s32.totalorder %s190, %s191
      %p200 = scmp.eq.s32.totalorder %s33, 0
      %p201 = por %p199, %p200
      %p202 = scmp.ne.s32.totalorder %s190, %s191
      %p203 = scmp.eq.s32.totalorder %s34, 1
      %p204 = por %p202, %p203
      %p206 = scmp.ne.s32.totalorder %s191, %s205
      %p207 = scmp.eq.s32.totalorder %s34, 0
      %p208 = por %p206, %p207
      %s210 = sadd.s32 %s209, 1
      %p213 = scmp.eq.s32.totalorder %s28, 1
      %p214 = scmp.ne.s32.totalorder %s209, %s211
      %p215 = scmp.eq.s32.totalorder %s28, 0
      %p216 = por %p214, %p215
      %p217 = scmp.ne.s32.totalorder %s209, %s211
      %p218 = scmp.eq.s32.totalorder %s33, 1
      %p219 = por %p217, %p218
      %p220 = scmp.ne.s32.totalorder %s211, %s212
      %p221 = scmp.eq.s32.totalorder %s33, 0
      %p222 = por %p220, %p221
      %p223 = scmp.ne.s32.totalorder %s211, %s212
      %p224 = scmp.eq.s32.totalorder %s34, 1
      %p225 = por %p223, %p224
      %p227 = scmp.ne.s32.totalorder %s212, %s226
      %p228 = scmp.eq.s32.totalorder %s34, 0
      %p229 = por %p227, %p228
      %s231 = sadd.s32 %s230, 1
      %p234 = scmp.eq.s32.totalorder %s28, 1
      %p235 = scmp.ne.s32.totalorder %s230, %s232
      %p236 = scmp.eq.s32.totalorder %s28, 0
      %p237 = por %p235, %p236
      %p238 = scmp.ne.s32.totalorder %s230, %s232
      %p239 = scmp.eq.s32.totalorder %s33, 1
      %p240 = por %p238, %p239
      %p241 = scmp.ne.s32.totalorder %s232, %s233
      %p242 = scmp.eq.s32.totalorder %s33, 0
      %p243 = por %p241, %p242
      %p244 = scmp.ne.s32.totalorder %s232, %s233
      %p245 = scmp.eq.s32.totalorder %s34, 1
      %p246 = por %p244, %p245
      %p248 = scmp.ne.s32.totalorder %s233, %s247
      %p249 = scmp.eq.s32.totalorder %s34, 0
      %p250 = por %p248, %p249
      %s252 = sadd.s32 %s251, 1
      %p255 = scmp.eq.s32.totalorder %s28, 1
      %p256 = scmp.ne.s32.totalorder %s251, %s253
      %p257 = scmp.eq.s32.totalorder %s28, 0
      %p258 = por %p256, %p257
      %p259 = scmp.ne.s32.totalorder %s251, %s253
      %p260 = scmp.eq.s32.totalorder %s33, 1
      %p261 = por %p259, %p260
      %p262 = scmp.ne.s32.totalorder %s253, %s254
      %p263 = scmp.eq.s32.totalorder %s33, 0
      %p264 = por %p262, %p263
      %p265 = scmp.ne.s32.totalorder %s253, %s254
      %p266 = scmp.eq.s32.totalorder %s34, 1
      %p267 = por %p265, %p266
      %p269 = scmp.ne.s32.totalorder %s254, %s268
      %p270 = scmp.eq.s32.totalorder %s34, 0
      %p271 = por %p269, %p270
      %s273 = sadd.s32 %s272, 1
      %p276 = scmp.eq.s32.totalorder %s28, 1
      %p277 = scmp.ne.s32.totalorder %s272, %s274
      %p278 = scmp.eq.s32.totalorder %s28, 0
      %p279 = por %p277, %p278
      %p280 = scmp.ne.s32.totalorder %s272, %s274
      %p281 = scmp.eq.s32.totalorder %s33, 1
      %p282 = por %p280, %p281
      %p283 = scmp.ne.s32.totalorder %s274, %s275
      %p284 = scmp.eq.s32.totalorder %s33, 0
      %p285 = por %p283, %p284
      %p286 = scmp.ne.s32.totalorder %s274, %s275
      %p287 = scmp.eq.s32.totalorder %s34, 1
      %p288 = por %p286, %p287
      %p290 = scmp.ne.s32.totalorder %s275, %s289
      %p291 = scmp.eq.s32.totalorder %s34, 0
      %p292 = por %p290, %p291
      %s294 = sadd.s32 %s293, 1
      %p297 = scmp.eq.s32.totalorder %s28, 1
      %p298 = scmp.ne.s32.totalorder %s293, %s295
      %p299 = scmp.eq.s32.totalorder %s28, 0
      %p300 = por %p298, %p299
      %p301 = scmp.ne.s32.totalorder %s293, %s295
      %p302 = scmp.eq.s32.totalorder %s33, 1
      %p303 = por %p301, %p302
      %p304 = scmp.ne.s32.totalorder %s295, %s296
      %p305 = scmp.eq.s32.totalorder %s33, 0
      %p306 = por %p304, %p305
      %p307 = scmp.ne.s32.totalorder %s295, %s296
      %p308 = scmp.eq.s32.totalorder %s34, 1
      %p309 = por %p307, %p308
      %p311 = scmp.ne.s32.totalorder %s296, %s310
      %p312 = scmp.eq.s32.totalorder %s34, 0
      %p313 = por %p311, %p312
      %s315 = sadd.s32 %s314, 1
      %p318 = scmp.eq.s32.totalorder %s28, 1
      %p319 = scmp.ne.s32.totalorder %s314, %s316
      %p320 = scmp.eq.s32.totalorder %s28, 0
      %p321 = por %p319, %p320
      %p322 = scmp.ne.s32.totalorder %s314, %s316
      %p323 = scmp.eq.s32.totalorder %s33, 1
      %p324 = por %p322, %p323
      %p325 = scmp.ne.s32.totalorder %s316, %s317
      %p326 = scmp.eq.s32.totalorder %s33, 0
      %p327 = por %p325, %p326
      %p328 = scmp.ne.s32.totalorder %s316, %s317
      %p329 = scmp.eq.s32.totalorder %s34, 1
      %p330 = por %p328, %p329
      %p332 = scmp.ne.s32.totalorder %s317, %s331
      %p333 = scmp.eq.s32.totalorder %s34, 0
      %p334 = por %p332, %p333
      %s336 = sadd.s32 %s335, 1
      %p339 = scmp.eq.s32.totalorder %s28, 1
      %p340 = scmp.ne.s32.totalorder %s335, %s337
      %p341 = scmp.eq.s32.totalorder %s28, 0
      %p342 = por %p340, %p341
      %p343 = scmp.ne.s32.totalorder %s335, %s337
      %p344 = scmp.eq.s32.totalorder %s33, 1
      %p345 = por %p343, %p344
      %p346 = scmp.ne.s32.totalorder %s337, %s338
      %p347 = scmp.eq.s32.totalorder %s33, 0
      %p348 = por %p346, %p347
      %p349 = scmp.ne.s32.totalorder %s337, %s338
      %p350 = scmp.eq.s32.totalorder %s34, 1
      %p351 = por %p349, %p350
      %p353 = scmp.ne.s32.totalorder %s338, %s352
      %p354 = scmp.eq.s32.totalorder %s34, 0
      %p355 = por %p353, %p354
      %s357 = sadd.s32 %s356, 1
      %p360 = scmp.eq.s32.totalorder %s28, 1
      %p361 = scmp.ne.s32.totalorder %s356, %s358
      %p362 = scmp.eq.s32.totalorder %s28, 0
      %p363 = por %p361, %p362
      %p364 = scmp.ne.s32.totalorder %s356, %s358
      %p365 = scmp.eq.s32.totalorder %s33, 1
      %p366 = por %p364, %p365
      %p367 = scmp.ne.s32.totalorder %s358, %s359
      %p368 = scmp.eq.s32.totalorder %s33, 0
      %p369 = por %p367, %p368
      %p370 = scmp.ne.s32.totalorder %s358, %s359
      %p371 = scmp.eq.s32.totalorder %s34, 1
      %p372 = por %p370, %p371
      %p374 = scmp.ne.s32.totalorder %s359, %s373
      %p375 = scmp.eq.s32.totalorder %s34, 0
      %p376 = por %p374, %p375
      %s378 = sadd.s32 %s377, 1
      %p381 = scmp.eq.s32.totalorder %s28, 1
      %p382 = scmp.ne.s32.totalorder %s377, %s379
      %p383 = scmp.eq.s32.totalorder %s28, 0
      %p384 = por %p382, %p383
      %p385 = scmp.ne.s32.totalorder %s377, %s379
      %p386 = scmp.eq.s32.totalorder %s33, 1
      %p387 = por %p385, %p386
      %p388 = scmp.ne.s32.totalorder %s379, %s380
      %p389 = scmp.eq.s32.totalorder %s33, 0
      %p390 = por %p388, %p389
      %p391 = scmp.ne.s32.totalorder %s379, %s380
      %p392 = scmp.eq.s32.totalorder %s34, 1
      %p393 = por %p391, %p392
      %p395 = scmp.ne.s32.totalorder %s380, %s394
      %p396 = scmp.eq.s32.totalorder %s34, 0
      %p397 = por %p395, %p396
      %s399 = sadd.s32 %s398, 1
      %p402 = scmp.eq.s32.totalorder %s28, 1
      %p403 = scmp.ne.s32.totalorder %s398, %s400
      %p404 = scmp.eq.s32.totalorder %s28, 0
      %p405 = por %p403, %p404
      %p406 = scmp.ne.s32.totalorder %s398, %s400
      %p407 = scmp.eq.s32.totalorder %s33, 1
      %p408 = por %p406, %p407
      %p409 = scmp.ne.s32.totalorder %s400, %s401
      %p410 = scmp.eq.s32.totalorder %s33, 0
      %p411 = por %p409, %p410
      %p412 = scmp.ne.s32.totalorder %s400, %s401
      %p413 = scmp.eq.s32.totalorder %s34, 1
      %p414 = por %p412, %p413
      %p416 = scmp.ne.s32.totalorder %s401, %s415
      %p417 = scmp.eq.s32.totalorder %s34, 0
      %p418 = por %p416, %p417
      %s420 = sadd.s32 %s419, 1
      %p423 = scmp.eq.s32.totalorder %s28, 1
      %p424 = scmp.ne.s32.totalorder %s419, %s421
      %p425 = scmp.eq.s32.totalorder %s28, 0
      %p426 = por %p424, %p425
      %p427 = scmp.ne.s32.totalorder %s419, %s421
      %p428 = scmp.eq.s32.totalorder %s33, 1
      %p429 = por %p427, %p428
      %p430 = scmp.ne.s32.totalorder %s421, %s422
      %p431 = scmp.eq.s32.totalorder %s33, 0
      %p432 = por %p430, %p431
      %p433 = scmp.ne.s32.totalorder %s421, %s422
      %p434 = scmp.eq.s32.totalorder %s34, 1
      %p435 = por %p433, %p434
      %p437 = scmp.ne.s32.totalorder %s422, %s436
      %p438 = scmp.eq.s32.totalorder %s34, 0
      %p439 = por %p437, %p438
      %s440 = ssub.s32 %s28, %s35
      %p441 = scmp.eq.s32.totalorder %s440, 0
      %s443 = sadd.s32 %s442, 1
      %s444 = scalar_select %p441, %s442, %s443
      %p447 = pneg %p441
      %p448 = scmp.eq.s32.totalorder %s28, 1
      %p449 = por %p447, %p448
      %p450 = scmp.ne.s32.totalorder %s442, %s445
      %p451 = scmp.eq.s32.totalorder %s28, 0
      %p452 = por %p450, %p451
      %p453 = scmp.ne.s32.totalorder %s442, %s445
      %p454 = scmp.eq.s32.totalorder %s33, 1
      %p455 = por %p453, %p454
      %p456 = scmp.ne.s32.totalorder %s445, %s446
      %p457 = scmp.eq.s32.totalorder %s33, 0
      %p458 = por %p456, %p457
      %p459 = scmp.ne.s32.totalorder %s445, %s446
      %p460 = scmp.eq.s32.totalorder %s34, 1
      %p461 = por %p459, %p460
      %p463 = scmp.ne.s32.totalorder %s446, %s462
      %p464 = scmp.eq.s32.totalorder %s34, 0
      %p465 = por %p463, %p464
      %p466 = scmp.le.s32.totalorder 1, %s28
      %p467 = scmp.lt.s32.totalorder %s28, 3
      %p468 = pnand %p466, %p467
      %p469 = pneg %p468
      // Predicated region
      $region9: #{tpu_custom_call.1} parent=5 // pred_check
        _
      $region10: #{tpu_custom_call.1} parent=5 // pred_check_branch
        %471 = sbr.rel (%p468) target = $region12
      $region11: #{tpu_custom_call.1} parent=5 // pred_region
        %s472 = ssub.s32 %s28, 1
        // Predicated region
        $region13: #{tpu_custom_call.1} parent=11 // pred_check
          %p473 = pneg %p75
        $region14: #{tpu_custom_call.1} parent=11 // pred_check_branch
          %475 = sbr.rel (%p473) target = $region16
        $region15: #{tpu_custom_call.1} parent=11 // pred_region
          _
        $region16: #{tpu_custom_call.1} parent=11 // pred_fallthru
          _
        // Predicated region
        $region17: #{tpu_custom_call.1} parent=11 // pred_check
          %p476 = pneg %p96
        $region18: #{tpu_custom_call.1} parent=11 // pred_check_branch
          %478 = sbr.rel (%p476) target = $region20
        $region19: #{tpu_custom_call.1} parent=11 // pred_region
          _
        $region20: #{tpu_custom_call.1} parent=11 // pred_fallthru
          _
        // Predicated region
        $region21: #{tpu_custom_call.1} parent=11 // pred_check
          %p479 = pneg %p117
        $region22: #{tpu_custom_call.1} parent=11 // pred_check_branch
          %481 = sbr.rel (%p479) target = $region24
        $region23: #{tpu_custom_call.1} parent=11 // pred_region
          _
        $region24: #{tpu_custom_call.1} parent=11 // pred_fallthru
          _
        // Predicated region
        $region25: #{tpu_custom_call.1} parent=11 // pred_check
          %p482 = pneg %p138
        $region26: #{tpu_custom_call.1} parent=11 // pred_check_branch
          %484 = sbr.rel (%p482) target = $region28
        $region27: #{tpu_custom_call.1} parent=11 // pred_region
          _
        $region28: #{tpu_custom_call.1} parent=11 // pred_fallthru
          _
        // Predicated region
        $region29: #{tpu_custom_call.1} parent=11 // pred_check
          %p485 = pneg %p159
        $region30: #{tpu_custom_call.1} parent=11 // pred_check_branch
          %487 = sbr.rel (%p485) target = $region32
        $region31: #{tpu_custom_call.1} parent=11 // pred_region
          _
        $region32: #{tpu_custom_call.1} parent=11 // pred_fallthru
          _
        // Predicated region
        $region33: #{tpu_custom_call.1} parent=11 // pred_check
          %p488 = pneg %p180
        $region34: #{tpu_custom_call.1} parent=11 // pred_check_branch
          %490 = sbr.rel (%p488) target = $region36
        $region35: #{tpu_custom_call.1} parent=11 // pred_region
          _
        $region36: #{tpu_custom_call.1} parent=11 // pred_fallthru
          _
        // Predicated region
        $region37: #{tpu_custom_call.1} parent=11 // pred_check
          %p491 = pneg %p201
        $region38: #{tpu_custom_call.1} parent=11 // pred_check_branch
          %493 = sbr.rel (%p491) target = $region40
        $region39: #{tpu_custom_call.1} parent=11 // pred_region
          _
        $region40: #{tpu_custom_call.1} parent=11 // pred_fallthru
          _
        // Predicated region
        $region41: #{tpu_custom_call.1} parent=11 // pred_check
          %p494 = pneg %p222
        $region42: #{tpu_custom_call.1} parent=11 // pred_check_branch
          %496 = sbr.rel (%p494) target = $region44
        $region43: #{tpu_custom_call.1} parent=11 // pred_region
          _
        $region44: #{tpu_custom_call.1} parent=11 // pred_fallthru
          _
        // Predicated region
        $region45: #{tpu_custom_call.1} parent=11 // pred_check
          %p497 = pneg %p243
        $region46: #{tpu_custom_call.1} parent=11 // pred_check_branch
          %499 = sbr.rel (%p497) target = $region48
        $region47: #{tpu_custom_call.1} parent=11 // pred_region
          _
        $region48: #{tpu_custom_call.1} parent=11 // pred_fallthru
          _
        // Predicated region
        $region49: #{tpu_custom_call.1} parent=11 // pred_check
          %p500 = pneg %p264
        $region50: #{tpu_custom_call.1} parent=11 // pred_check_branch
          %502 = sbr.rel (%p500) target = $region52
        $region51: #{tpu_custom_call.1} parent=11 // pred_region
          _
        $region52: #{tpu_custom_call.1} parent=11 // pred_fallthru
          _
        // Predicated region
        $region53: #{tpu_custom_call.1} parent=11 // pred_check
          %p503 = pneg %p285
        $region54: #{tpu_custom_call.1} parent=11 // pred_check_branch
          %505 = sbr.rel (%p503) target = $region56
        $region55: #{tpu_custom_call.1} parent=11 // pred_region
          _
        $region56: #{tpu_custom_call.1} parent=11 // pred_fallthru
          _
        // Predicated region
        $region57: #{tpu_custom_call.1} parent=11 // pred_check
          %p506 = pneg %p306
        $region58: #{tpu_custom_call.1} parent=11 // pred_check_branch
          %508 = sbr.rel (%p506) target = $region60
        $region59: #{tpu_custom_call.1} parent=11 // pred_region
          _
        $region60: #{tpu_custom_call.1} parent=11 // pred_fallthru
          _
        // Predicated region
        $region61: #{tpu_custom_call.1} parent=11 // pred_check
          %p509 = pneg %p327
        $region62: #{tpu_custom_call.1} parent=11 // pred_check_branch
          %511 = sbr.rel (%p509) target = $region64
        $region63: #{tpu_custom_call.1} parent=11 // pred_region
          _
        $region64: #{tpu_custom_call.1} parent=11 // pred_fallthru
          _
        // Predicated region
        $region65: #{tpu_custom_call.1} parent=11 // pred_check
          %p512 = pneg %p348
        $region66: #{tpu_custom_call.1} parent=11 // pred_check_branch
          %514 = sbr.rel (%p512) target = $region68
        $region67: #{tpu_custom_call.1} parent=11 // pred_region
          _
        $region68: #{tpu_custom_call.1} parent=11 // pred_fallthru
          _
        // Predicated region
        $region69: #{tpu_custom_call.1} parent=11 // pred_check
          %p515 = pneg %p369
        $region70: #{tpu_custom_call.1} parent=11 // pred_check_branch
          %517 = sbr.rel (%p515) target = $region72
        $region71: #{tpu_custom_call.1} parent=11 // pred_region
          _
        $region72: #{tpu_custom_call.1} parent=11 // pred_fallthru
          _
        // Predicated region
        $region73: #{tpu_custom_call.1} parent=11 // pred_check
          %p518 = pneg %p390
        $region74: #{tpu_custom_call.1} parent=11 // pred_check_branch
          %520 = sbr.rel (%p518) target = $region76
        $region75: #{tpu_custom_call.1} parent=11 // pred_region
          _
        $region76: #{tpu_custom_call.1} parent=11 // pred_fallthru
          _
        // Predicated region
        $region77: #{tpu_custom_call.1} parent=11 // pred_check
          %p521 = pneg %p411
        $region78: #{tpu_custom_call.1} parent=11 // pred_check_branch
          %523 = sbr.rel (%p521) target = $region80
        $region79: #{tpu_custom_call.1} parent=11 // pred_region
          _
        $region80: #{tpu_custom_call.1} parent=11 // pred_fallthru
          _
        // Predicated region
        $region81: #{tpu_custom_call.1} parent=11 // pred_check
          %p524 = pneg %p432
        $region82: #{tpu_custom_call.1} parent=11 // pred_check_branch
          %526 = sbr.rel (%p524) target = $region84
        $region83: #{tpu_custom_call.1} parent=11 // pred_region
          _
        $region84: #{tpu_custom_call.1} parent=11 // pred_fallthru
          _
      $region12: #{tpu_custom_call.1} parent=5 // pred_fallthru
        _
      %p527 = scmp.lt.s32.totalorder %s28, 2
      // Predicated region
      $region85: #{tpu_custom_call.1} parent=5 // pred_check
        %p528 = pneg %p527
      $region86: #{tpu_custom_call.1} parent=5 // pred_check_branch
        %530 = sbr.rel (%p528) target = $region88
      $region87: #{tpu_custom_call.1} parent=5 // pred_region
        // Predicated region
        $region89: #{tpu_custom_call.1} parent=87 // pred_check
          %p531 = pneg %p48
        $region90: #{tpu_custom_call.1} parent=87 // pred_check_branch
          %533 = sbr.rel (%p531) target = $region92
        $region91: #{tpu_custom_call.1} parent=87 // pred_region
          %s534 = smul.u32 7, %s28
          %p535 = scmp.lt.s32.totalorder %s534, 13
          %s536 = scalar_select %p535, %s534, 13
          %s537 = smul.addr %s536, 2
          %s538 = smul.addr %s537, 8
          %s539 = scalar_lea.vmem %s0, %s538
          %s540 = smul.u32 7, %s28
        $region92: #{tpu_custom_call.1} parent=87 // pred_fallthru
          _
      $region88: #{tpu_custom_call.1} parent=5 // pred_fallthru
        _
      %p541 = scmp.le.s32.totalorder 1, %s28
      %p542 = scmp.lt.s32.totalorder %s28, 3
      %p543 = pnand %p541, %p542
      %p544 = pneg %p543
      // Predicated region
      $region93: #{tpu_custom_call.1} parent=5 // pred_check
        _
      $region94: #{tpu_custom_call.1} parent=5 // pred_check_branch
        %546 = sbr.rel (%p543) target = $region96
      $region95: #{tpu_custom_call.1} parent=5 // pred_region
        %s547 = ssub.s32 %s28, 1
        %s548 = smul.u32 7, %s33
        %p549 = scmp.lt.s32.totalorder %s548, 13
        %s550 = scalar_select %p549, %s548, 13
        %s551 = smul.addr %s550, 2
        %s552 = smul.addr %s551, 8
        %s553 = scalar_lea.vmem %s0, %s552
        %p554 = pneg %p54
        %p555 = pneg %p51
        %p556 = pneg %p75
        %p557 = pneg %p72
        %p558 = pneg %p96
        %p559 = pneg %p93
        %p560 = pneg %p117
        %p561 = pneg %p114
        %p562 = pneg %p138
        %p563 = pneg %p135
        %p564 = pneg %p159
        %p565 = pneg %p156
        %p566 = pneg %p180
        %p567 = pneg %p177
        %p568 = pneg %p201
        %p569 = pneg %p198
        %p570 = pneg %p222
        %p571 = pneg %p219
        %p572 = pneg %p243
        %p573 = pneg %p240
        %p574 = pneg %p264
        %p575 = pneg %p261
        %p576 = pneg %p285
        %p577 = pneg %p282
        %p578 = pneg %p306
        %p579 = pneg %p303
        %p580 = pneg %p327
        %p581 = pneg %p324
        %p582 = pneg %p348
        %p583 = pneg %p345
        %p584 = pneg %p369
        %p585 = pneg %p366
        %p586 = pneg %p390
        %p587 = pneg %p387
        %p588 = pneg %p411
        %p589 = pneg %p408
        %p590 = pneg %p432
        %p591 = pneg %p429
        %p592 = pneg %p458
        %p593 = pneg %p455
        %s594 = sand.u32 %s445, 1
        %s595 = scalar_lea.sflag [#allocation3], %s594
        %s596 = sand.u32 %s445, 1
        %s597 = smul.addr %s596, 7
        %s598 = scalar_lea.vmem [#allocation2], %s597
        %s599 = smul.u32 7, %s33
        %p600 = scmp.lt.s32.totalorder %s599, 13
        %s601 = scalar_select %p600, %s599, 13
        %s602 = smul.addr %s601, 2
        %s603 = smul.addr %s602, 8
        %s604 = scalar_lea.vmem %s0, %s603
        %s605 = smul.u32 7, %s33
        %s606 = smul.u32 7, %s33
        %v607 = vld [vmem:[%s604] sm:$0xff]
        %v608 = vld [vmem:[%s604 + $0x8] sm:$0xff]
        %v609 = vld [vmem:[%s604 + $0x10] sm:$0xff]
        %v610 = vld [vmem:[%s604 + $0x18] sm:$0xff]
        %v611 = vld [vmem:[%s604 + $0x20] sm:$0xff]
        %v612 = vld [vmem:[%s604 + $0x28] sm:$0xff]
        %v613 = vld [vmem:[%s604 + $0x30] sm:$0xff]
        %v614 = vld [vmem:[%s604 + $0x38] sm:$0xff]
        %v615 = vld [vmem:[%s604 + $0x40] sm:$0xff]
        %v616 = vld [vmem:[%s604 + $0x48] sm:$0xff]
        %v617 = vld [vmem:[%s604 + $0x50] sm:$0xff]
        %v618 = vld [vmem:[%s604 + $0x58] sm:$0xff]
        %v619 = vld [vmem:[%s604 + $0x60] sm:$0xff]
        %v620 = vld [vmem:[%s604 + $0x68] sm:$0xff]
        %v621 = vlaneseq
        %v622 = vshrl.u32 %v621, 7
        %v623 = vadd.s32 %v622, 8
        %v624 = vadd.s32 %v622, 16
        %v625 = vadd.s32 %v622, 24
        %v626 = vadd.s32 %v622, 32
        %v627 = vadd.s32 %v622, 40
        %v628 = vadd.s32 %v622, 48
        %v629 = vadd.s32 %v622, 56
        %v630 = vadd.s32 %v622, 64
        %v631 = vadd.s32 %v622, 72
        %v632 = vadd.s32 %v622, 80
        %v633 = vadd.s32 %v622, 88
        %v634 = vadd.s32 %v622, 96
        %v635 = vadd.s32 %v622, 104
        %vm636 = vcmp.lt.s32.totalorder %v622, 0
        %v637 = vsub.s32 0, %v622
        %v638 = vsel %vm636, %v637, %v622
        %v639 = vshrl.u32 %v638, 4
        %v640 = vand.u32 %v638, 15
        %v641 = vsub.s32 0, %v640
        %v642 = vsel %vm636, %v641, %v640
        %vm643 = vcmp.lt.s32.totalorder %v623, 0
        %v644 = vsub.s32 0, %v623
        %v645 = vsel %vm643, %v644, %v623
        %v646 = vshrl.u32 %v645, 4
        %v647 = vand.u32 %v645, 15
        %v648 = vsub.s32 0, %v647
        %v649 = vsel %vm643, %v648, %v647
        %vm650 = vcmp.lt.s32.totalorder %v624, 0
        %v651 = vsub.s32 0, %v624
        %v652 = vsel %vm650, %v651, %v624
        %v653 = vshrl.u32 %v652, 4
        %v654 = vand.u32 %v652, 15
        %v655 = vsub.s32 0, %v654
        %v656 = vsel %vm650, %v655, %v654
        %vm657 = vcmp.lt.s32.totalorder %v625, 0
        %v658 = vsub.s32 0, %v625
        %v659 = vsel %vm657, %v658, %v625
        %v660 = vshrl.u32 %v659, 4
        %v661 = vand.u32 %v659, 15
        %v662 = vsub.s32 0, %v661
        %v663 = vsel %vm657, %v662, %v661
        %vm664 = vcmp.lt.s32.totalorder %v626, 0
        %v665 = vsub.s32 0, %v626
        %v666 = vsel %vm664, %v665, %v626
        %v667 = vshrl.u32 %v666, 4
        %v668 = vand.u32 %v666, 15
        %v669 = vsub.s32 0, %v668
        %v670 = vsel %vm664, %v669, %v668
        %vm671 = vcmp.lt.s32.totalorder %v627, 0
        %v672 = vsub.s32 0, %v627
        %v673 = vsel %vm671, %v672, %v627
        %v674 = vshrl.u32 %v673, 4
        %v675 = vand.u32 %v673, 15
        %v676 = vsub.s32 0, %v675
        %v677 = vsel %vm671, %v676, %v675
        %vm678 = vcmp.lt.s32.totalorder %v628, 0
        %v679 = vsub.s32 0, %v628
        %v680 = vsel %vm678, %v679, %v628
        %v681 = vshrl.u32 %v680, 4
        %v682 = vand.u32 %v680, 15
        %v683 = vsub.s32 0, %v682
        %v684 = vsel %vm678, %v683, %v682
        %vm685 = vcmp.lt.s32.totalorder %v629, 0
        %v686 = vsub.s32 0, %v629
        %v687 = vsel %vm685, %v686, %v629
        %v688 = vshrl.u32 %v687, 4
        %v689 = vand.u32 %v687, 15
        %v690 = vsub.s32 0, %v689
        %v691 = vsel %vm685, %v690, %v689
        %vm692 = vcmp.lt.s32.totalorder %v630, 0
        %v693 = vsub.s32 0, %v630
        %v694 = vsel %vm692, %v693, %v630
        %v695 = vshrl.u32 %v694, 4
        %v696 = vand.u32 %v694, 15
        %v697 = vsub.s32 0, %v696
        %v698 = vsel %vm692, %v697, %v696
        %vm699 = vcmp.lt.s32.totalorder %v631, 0
        %v700 = vsub.s32 0, %v631
        %v701 = vsel %vm699, %v700, %v631
        %v702 = vshrl.u32 %v701, 4
        %v703 = vand.u32 %v701, 15
        %v704 = vsub.s32 0, %v703
        %v705 = vsel %vm699, %v704, %v703
        %vm706 = vcmp.lt.s32.totalorder %v632, 0
        %v707 = vsub.s32 0, %v632
        %v708 = vsel %vm706, %v707, %v632
        %v709 = vshrl.u32 %v708, 4
        %v710 = vand.u32 %v708, 15
        %v711 = vsub.s32 0, %v710
        %v712 = vsel %vm706, %v711, %v710
        %vm713 = vcmp.lt.s32.totalorder %v633, 0
        %v714 = vsub.s32 0, %v633
        %v715 = vsel %vm713, %v714, %v633
        %v716 = vshrl.u32 %v715, 4
        %v717 = vand.u32 %v715, 15
        %v718 = vsub.s32 0, %v717
        %v719 = vsel %vm713, %v718, %v717
        %vm720 = vcmp.lt.s32.totalorder %v634, 0
        %v721 = vsub.s32 0, %v634
        %v722 = vsel %vm720, %v721, %v634
        %v723 = vshrl.u32 %v722, 4
        %v724 = vand.u32 %v722, 15
        %v725 = vsub.s32 0, %v724
        %v726 = vsel %vm720, %v725, %v724
        %vm727 = vcmp.lt.s32.totalorder %v635, 0
        %v728 = vsub.s32 0, %v635
        %v729 = vsel %vm727, %v728, %v635
        %v730 = vshrl.u32 %v729, 4
        %v731 = vand.u32 %v729, 15
        %v732 = vsub.s32 0, %v731
        %v733 = vsel %vm727, %v732, %v731
        %vm734 = vcmp.ne.s32.totalorder %v642, 0
        %vm735 = vcmp.ne.s32.totalorder %v649, 0
        %vm736 = vcmp.ne.s32.totalorder %v656, 0
        %vm737 = vcmp.ne.s32.totalorder %v663, 0
        %vm738 = vcmp.ne.s32.totalorder %v670, 0
        %vm739 = vcmp.ne.s32.totalorder %v677, 0
        %vm740 = vcmp.ne.s32.totalorder %v684, 0
        %vm741 = vcmp.ne.s32.totalorder %v691, 0
        %vm742 = vcmp.ne.s32.totalorder %v698, 0
        %vm743 = vcmp.ne.s32.totalorder %v705, 0
        %vm744 = vcmp.ne.s32.totalorder %v712, 0
        %vm745 = vcmp.ne.s32.totalorder %v719, 0
        %vm746 = vcmp.ne.s32.totalorder %v726, 0
        %vm747 = vcmp.ne.s32.totalorder %v733, 0
        %vm748 = vcmp.lt.s32.totalorder %v642, 0
        %vm749 = vcmp.lt.s32.totalorder %v649, 0
        %vm750 = vcmp.lt.s32.totalorder %v656, 0
        %vm751 = vcmp.lt.s32.totalorder %v663, 0
        %vm752 = vcmp.lt.s32.totalorder %v670, 0
        %vm753 = vcmp.lt.s32.totalorder %v677, 0
        %vm754 = vcmp.lt.s32.totalorder %v684, 0
        %vm755 = vcmp.lt.s32.totalorder %v691, 0
        %vm756 = vcmp.lt.s32.totalorder %v698, 0
        %vm757 = vcmp.lt.s32.totalorder %v705, 0
        %vm758 = vcmp.lt.s32.totalorder %v712, 0
        %vm759 = vcmp.lt.s32.totalorder %v719, 0
        %vm760 = vcmp.lt.s32.totalorder %v726, 0
        %vm761 = vcmp.lt.s32.totalorder %v733, 0
        %vm762 = vmand %vm748, %vm734
        %vm763 = vmand %vm749, %vm735
        %vm764 = vmand %vm750, %vm736
        %vm765 = vmand %vm751, %vm737
        %vm766 = vmand %vm752, %vm738
        %vm767 = vmand %vm753, %vm739
        %vm768 = vmand %vm754, %vm740
        %vm769 = vmand %vm755, %vm741
        %vm770 = vmand %vm756, %vm742
        %vm771 = vmand %vm757, %vm743
        %vm772 = vmand %vm758, %vm744
        %vm773 = vmand %vm759, %vm745
        %vm774 = vmand %vm760, %vm746
        %vm775 = vmand %vm761, %vm747
        %v776 = vadd.s32 %v642, 16
        %v777 = vadd.s32 %v649, 16
        %v778 = vadd.s32 %v656, 16
        %v779 = vadd.s32 %v663, 16
        %v780 = vadd.s32 %v670, 16
        %v781 = vadd.s32 %v677, 16
        %v782 = vadd.s32 %v684, 16
        %v783 = vadd.s32 %v691, 16
        %v784 = vadd.s32 %v698, 16
        %v785 = vadd.s32 %v705, 16
        %v786 = vadd.s32 %v712, 16
        %v787 = vadd.s32 %v719, 16
        %v788 = vadd.s32 %v726, 16
        %v789 = vadd.s32 %v733, 16
        %v790 = vsel %vm762, %v776, %v642
        %v791 = vsel %vm763, %v777, %v649
        %v792 = vsel %vm764, %v778, %v656
        %v793 = vsel %vm765, %v779, %v663
        %v794 = vsel %vm766, %v780, %v670
        %v795 = vsel %vm767, %v781, %v677
        %v796 = vsel %vm768, %v782, %v684
        %v797 = vsel %vm769, %v783, %v691
        %v798 = vsel %vm770, %v784, %v698
        %v799 = vsel %vm771, %v785, %v705
        %v800 = vsel %vm772, %v786, %v712
        %v801 = vsel %vm773, %v787, %v719
        %v802 = vsel %vm774, %v788, %v726
        %v803 = vsel %vm775, %v789, %v733
        %v804 = vrot.slane %v607, 7
        %v805 = vrot.slane %v608, 7
        %v806 = vrot.slane %v609, 7
        %v807 = vrot.slane %v610, 7
        %v808 = vrot.slane %v611, 7
        %v809 = vrot.slane %v612, 7
        %v810 = vrot.slane %v613, 7
        %v811 = vrot.slane %v614, 7
        %v812 = vrot.slane %v615, 7
        %v813 = vrot.slane %v616, 7
        %v814 = vrot.slane %v617, 7
        %v815 = vrot.slane %v618, 7
        %v816 = vrot.slane %v619, 7
        %v817 = vrot.slane %v620, 7
        %vm818 = vcmp.lt.s32.totalorder %v622, 1
        %v819 = vsel %vm818, %v816, %v817
        %v820 = vsel %vm818, %v815, %v816
        %v821 = vsel %vm818, %v814, %v815
        %v822 = vsel %vm818, %v813, %v814
        %v823 = vsel %vm818, %v812, %v813
        %v824 = vsel %vm818, %v811, %v812
        %v825 = vsel %vm818, %v810, %v811
        %v826 = vsel %vm818, %v809, %v810
        %v827 = vsel %vm818, %v808, %v809
        %v828 = vsel %vm818, %v807, %v808
        %v829 = vsel %vm818, %v806, %v807
        %v830 = vsel %vm818, %v805, %v806
        %v831 = vsel %vm818, %v804, %v805
        %v832 = vsel %vm818, %v817, %v804
        %vm833 = vcmp.ge.s32.totalorder %v790, 1
        %vm834 = vcmp.ge.s32.totalorder %v791, 1
        %vm835 = vcmp.ge.s32.totalorder %v792, 1
        %vm836 = vcmp.ge.s32.totalorder %v793, 1
        %vm837 = vcmp.ge.s32.totalorder %v794, 1
        %vm838 = vcmp.ge.s32.totalorder %v795, 1
        %vm839 = vcmp.ge.s32.totalorder %v796, 1
        %vm840 = vcmp.ge.s32.totalorder %v797, 1
        %vm841 = vcmp.ge.s32.totalorder %v798, 1
        %vm842 = vcmp.ge.s32.totalorder %v799, 1
        %vm843 = vcmp.ge.s32.totalorder %v800, 1
        %vm844 = vcmp.ge.s32.totalorder %v801, 1
        %vm845 = vcmp.ge.s32.totalorder %v802, 1
        %vm846 = vcmp.ge.s32.totalorder %v803, 1
        %v847 = vsel %vm833, 1, 0
        %v848 = vsel %vm834, 1, 0
        %v849 = vsel %vm835, 1, 0
        %v850 = vsel %vm836, 1, 0
        %v851 = vsel %vm837, 1, 0
        %v852 = vsel %vm838, 1, 0
        %v853 = vsel %vm839, 1, 0
        %v854 = vsel %vm840, 1, 0
        %v855 = vsel %vm841, 1, 0
        %v856 = vsel %vm842, 1, 0
        %v857 = vsel %vm843, 1, 0
        %v858 = vsel %vm844, 1, 0
        %v859 = vsel %vm845, 1, 0
        %v860 = vsel %vm846, 1, 0
        %vm861 = vcmp.eq.s32.totalorder %v847, 1
        %vm862 = vcmp.eq.s32.totalorder %v848, 1
        %vm863 = vcmp.eq.s32.totalorder %v849, 1
        %vm864 = vcmp.eq.s32.totalorder %v850, 1
        %vm865 = vcmp.eq.s32.totalorder %v851, 1
        %vm866 = vcmp.eq.s32.totalorder %v852, 1
        %vm867 = vcmp.eq.s32.totalorder %v853, 1
        %vm868 = vcmp.eq.s32.totalorder %v854, 1
        %vm869 = vcmp.eq.s32.totalorder %v855, 1
        %vm870 = vcmp.eq.s32.totalorder %v856, 1
        %vm871 = vcmp.eq.s32.totalorder %v857, 1
        %vm872 = vcmp.eq.s32.totalorder %v858, 1
        %vm873 = vcmp.eq.s32.totalorder %v859, 1
        %vm874 = vcmp.eq.s32.totalorder %v860, 1
        %v875 = vsel %vm861, %v832, 0.0
        %v876 = vsel %vm862, %v831, 0.0
        %v877 = vsel %vm863, %v830, 0.0
        %v878 = vsel %vm864, %v829, 0.0
        %v879 = vsel %vm865, %v828, 0.0
        %v880 = vsel %vm866, %v827, 0.0
        %v881 = vsel %vm867, %v826, 0.0
        %v882 = vsel %vm868, %v825, 0.0
        %v883 = vsel %vm869, %v824, 0.0
        %v884 = vsel %vm870, %v823, 0.0
        %v885 = vsel %vm871, %v822, 0.0
        %v886 = vsel %vm872, %v821, 0.0
        %v887 = vsel %vm873, %v820, 0.0
        %v888 = vsel %vm874, %v819, 0.0
        %903 = vrot.lane.b32.xlu0 %v607, 4
        %v904 = vpop.permute.xlu0 %903
        %905 = vrot.lane.b32.xlu0 %v608, 4
        %v906 = vpop.permute.xlu0 %905
        %907 = vrot.lane.b32.xlu0 %v609, 4
        %v908 = vpop.permute.xlu0 %907
        %909 = vrot.lane.b32.xlu0 %v610, 4
        %v910 = vpop.permute.xlu0 %909
        %911 = vrot.lane.b32.xlu0 %v611, 4
        %v912 = vpop.permute.xlu0 %911
        %913 = vrot.lane.b32.xlu0 %v612, 4
        %v914 = vpop.permute.xlu0 %913
        %915 = vrot.lane.b32.xlu0 %v613, 4
        %v916 = vpop.permute.xlu0 %915
        %917 = vrot.lane.b32.xlu0 %v614, 4
        %v918 = vpop.permute.xlu0 %917
        %919 = vrot.lane.b32.xlu0 %v615, 4
        %v920 = vpop.permute.xlu0 %919
        %921 = vrot.lane.b32.xlu0 %v616, 4
        %v922 = vpop.permute.xlu0 %921
        %923 = vrot.lane.b32.xlu0 %v617, 4
        %v924 = vpop.permute.xlu0 %923
        %925 = vrot.lane.b32.xlu0 %v618, 4
        %v926 = vpop.permute.xlu0 %925
        %927 = vrot.lane.b32.xlu0 %v619, 4
        %v928 = vpop.permute.xlu0 %927
        %929 = vrot.lane.b32.xlu0 %v620, 4
        %v930 = vpop.permute.xlu0 %929
        %vm945 = vcmask 31744
        %v946 = vsel %vm945, %v875, %v904
        %v947 = vsel %vm945, %v876, %v906
        %v948 = vsel %vm945, %v877, %v908
        %v949 = vsel %vm945, %v878, %v910
        %v950 = vsel %vm945, %v879, %v912
        %v951 = vsel %vm945, %v880, %v914
        %v952 = vsel %vm945, %v881, %v916
        %v953 = vsel %vm945, %v882, %v918
        %v954 = vsel %vm945, %v883, %v920
        %v955 = vsel %vm945, %v884, %v922
        %v956 = vsel %vm945, %v885, %v924
        %v957 = vsel %vm945, %v886, %v926
        %v958 = vsel %vm945, %v887, %v928
        %v959 = vsel %vm945, %v888, %v930
        %v960 = vld [vmem:[%s1] sm:$0xff]
        %v961 = vld [vmem:[%s2] sm:$0x1]
        %v963 = vlaneseq
        %v964 = vshrl.u32 %v963, 7
        %v965 = vsub.s32 0, %v964
        %v966 = vrot.slane %v961, %v965
        %vm968 = vcmask 64512
        %v970 = vsel %vm968, %v946, 0
        %v973 = vsel %vm968, %v947, 0
        %v976 = vsel %vm968, %v948, 0
        %v979 = vsel %vm968, %v949, 0
        %v982 = vsel %vm968, %v950, 0
        %v985 = vsel %vm968, %v951, 0
        %v988 = vsel %vm968, %v952, 0
        %v991 = vsel %vm968, %v953, 0
        %v994 = vsel %vm968, %v954, 0
        %v997 = vsel %vm968, %v955, 0
        %v1000 = vsel %vm968, %v956, 0
        %v1003 = vsel %vm968, %v957, 0
        %v1006 = vsel %vm968, %v958, 0
        %v1009 = vsel %vm968, %v959, 0
        %1011 = vmatprep.subr.mxu0 0.0
        %1012 = vmatpush1.msra.mxu0 %v960
        %1013 = vmatprep.subr.mxu0 0.0
        %1014 = vmatpush1.msra.mxu0 0.0
        %1015 = vmatprep.subr.mxu0 0.0
        %1016 = vmatpush1.msra.mxu0 0.0
        %1017 = vmatprep.subr.mxu0 0.0
        %1018 = vmatpush1.msra.mxu0 0.0
        %1019 = vmatprep.subr.mxu0 0.0
        %1020 = vmatpush1.msra.mxu0 0.0
        %1021 = vmatprep.subr.mxu0 0.0
        %1022 = vmatpush1.msra.mxu0 0.0
        %1023 = vmatprep.subr.mxu0 0.0
        %1024 = vmatpush1.msra.mxu0 0.0
        %1025 = vmatprep.subr.mxu0 0.0
        %1026 = vmatpush1.msra.mxu0 0.0
        %1027 = vmatprep.subr.mxu0 0.0
        %1028 = vmatpush1.msra.mxu0 0.0
        %1029 = vmatprep.subr.mxu0 0.0
        %1030 = vmatpush1.msra.mxu0 0.0
        %1031 = vmatprep.subr.mxu0 0.0
        %1032 = vmatpush1.msra.mxu0 0.0
        %1033 = vmatprep.subr.mxu0 0.0
        %1034 = vmatpush1.msra.mxu0 0.0
        %1035 = vmatprep.subr.mxu0 0.0
        %1036 = vmatpush1.msra.mxu0 0.0
        %1037 = vmatprep.subr.mxu0 0.0
        %1038 = vmatpush1.msra.mxu0 0.0
        %1039 = vmatprep.subr.mxu0 0.0
        %1040 = vmatpush1.msra.mxu0 0.0
        %1041 = vmatprep.subr.mxu0 0.0
        %1042 = vmatpush1.msra.mxu0 0.0
        %1043 = vmatprep.subr.mxu0 0.0
        %1044 = vmatpush1.msra.mxu0 0.0
        %1045 = vmatprep.subr.mxu0 0.0
        %1046 = vmatpush1.msra.mxu0 0.0
        %1047 = vmatprep.subr.mxu0 0.0
        %1048 = vmatpush1.msra.mxu0 0.0
        %1049 = vmatprep.subr.mxu0 0.0
        %1050 = vmatpush1.msra.mxu0 0.0
        %1051 = vmatprep.subr.mxu0 0.0
        %1052 = vmatpush1.msra.mxu0 0.0
        %1053 = vmatprep.subr.mxu0 0.0
        %1054 = vmatpush1.msra.mxu0 0.0
        %1055 = vmatprep.subr.mxu0 0.0
        %1056 = vmatpush1.msra.mxu0 0.0
        %1057 = vmatprep.subr.mxu0 0.0
        %1058 = vmatpush1.msra.mxu0 0.0
        %1059 = vmatprep.subr.mxu0 0.0
        %1060 = vmatpush1.msra.mxu0 0.0
        %1061 = vmatprep.subr.mxu0 0.0
        %1062 = vmatpush1.msra.mxu0 0.0
        %1063 = vmatprep.subr.mxu0 0.0
        %1064 = vmatpush1.msra.mxu0 0.0
        %1065 = vmatprep.subr.mxu0 0.0
        %1066 = vmatpush1.msra.mxu0 0.0
        %1067 = vmatprep.subr.mxu0 0.0
        %1068 = vmatpush1.msra.mxu0 0.0
        %1069 = vmatprep.subr.mxu0 0.0
        %1070 = vmatpush1.msra.mxu0 0.0
        %1071 = vmatprep.subr.mxu0 0.0
        %1072 = vmatpush1.msra.mxu0 0.0
        %1073 = vmatprep.subr.mxu0 0.0
        %1074 = vmatpush1.msra.mxu0 0.0
        %1075 = vmatprep.mubr.f32.mxu0 0.0
        %1076 = vmatmul.mubr.f32.gmra.mrb[0].mxu0 %v970
        %v1077 = vpop.f32.mrb[0].mxu0
        %v1078 = vadd.f32 %v966, %v1077
        %v1079 = vpop.f32.mrb[0].mxu0
        %1080 = vmatprep.mubr.f32.mxu0 0.0
        %1081 = vmatmul.mubr.f32.gmra.mrb[0].mxu0 %v973
        %v1082 = vpop.f32.mrb[0].mxu0
        %v1083 = vadd.f32 %v966, %v1082
        %v1084 = vpop.f32.mrb[0].mxu0
        %1085 = vmatprep.mubr.f32.mxu0 0.0
        %1086 = vmatmul.mubr.f32.gmra.mrb[0].mxu0 %v976
        %v1087 = vpop.f32.mrb[0].mxu0
        %v1088 = vadd.f32 %v966, %v1087
        %v1089 = vpop.f32.mrb[0].mxu0
        %1090 = vmatprep.mubr.f32.mxu0 0.0
        %1091 = vmatmul.mubr.f32.gmra.mrb[0].mxu0 %v979
        %v1092 = vpop.f32.mrb[0].mxu0
        %v1093 = vadd.f32 %v966, %v1092
        %v1094 = vpop.f32.mrb[0].mxu0
        %1095 = vmatprep.mubr.f32.mxu0 0.0
        %1096 = vmatmul.mubr.f32.gmra.mrb[0].mxu0 %v982
        %v1097 = vpop.f32.mrb[0].mxu0
        %v1098 = vadd.f32 %v966, %v1097
        %v1099 = vpop.f32.mrb[0].mxu0
        %1100 = vmatprep.mubr.f32.mxu0 0.0
        %1101 = vmatmul.mubr.f32.gmra.mrb[0].mxu0 %v985
        %v1102 = vpop.f32.mrb[0].mxu0
        %v1103 = vadd.f32 %v966, %v1102
        %v1104 = vpop.f32.mrb[0].mxu0
        %1105 = vmatprep.mubr.f32.mxu0 0.0
        %1106 = vmatmul.mubr.f32.gmra.mrb[0].mxu0 %v988
        %v1107 = vpop.f32.mrb[0].mxu0
        %v1108 = vadd.f32 %v966, %v1107
        %v1109 = vpop.f32.mrb[0].mxu0
        %1110 = vmatprep.mubr.f32.mxu0 0.0
        %1111 = vmatmul.mubr.f32.gmra.mrb[0].mxu0 %v991
        %v1112 = vpop.f32.mrb[0].mxu0
        %v1113 = vadd.f32 %v966, %v1112
        %v1114 = vpop.f32.mrb[0].mxu0
        %1115 = vmatprep.mubr.f32.mxu0 0.0
        %1116 = vmatmul.mubr.f32.gmra.mrb[0].mxu0 %v994
        %v1117 = vpop.f32.mrb[0].mxu0
        %v1118 = vadd.f32 %v966, %v1117
        %v1119 = vpop.f32.mrb[0].mxu0
        %1120 = vmatprep.mubr.f32.mxu0 0.0
        %1121 = vmatmul.mubr.f32.gmra.mrb[0].mxu0 %v997
        %v1122 = vpop.f32.mrb[0].mxu0
        %v1123 = vadd.f32 %v966, %v1122
        %v1124 = vpop.f32.mrb[0].mxu0
        %1125 = vmatprep.mubr.f32.mxu0 0.0
        %1126 = vmatmul.mubr.f32.gmra.mrb[0].mxu0 %v1000
        %v1127 = vpop.f32.mrb[0].mxu0
        %v1128 = vadd.f32 %v966, %v1127
        %v1129 = vpop.f32.mrb[0].mxu0
        %1130 = vmatprep.mubr.f32.mxu0 0.0
        %1131 = vmatmul.mubr.f32.gmra.mrb[0].mxu0 %v1003
        %v1132 = vpop.f32.mrb[0].mxu0
        %v1133 = vadd.f32 %v966, %v1132
        %v1134 = vpop.f32.mrb[0].mxu0
        %1135 = vmatprep.mubr.f32.mxu0 0.0
        %1136 = vmatmul.mubr.f32.gmra.mrb[0].mxu0 %v1006
        %v1137 = vpop.f32.mrb[0].mxu0
        %v1138 = vadd.f32 %v966, %v1137
        %v1139 = vpop.f32.mrb[0].mxu0
        %1140 = vmatprep.mubr.f32.mxu0 0.0
        %1141 = vmatmul.mubr.f32.gmra.mrb[0].mxu0 %v1009
        %v1142 = vpop.f32.mrb[0].mxu0
        %v1143 = vadd.f32 %v966, %v1142
        %v1144 = vpop.f32.mrb[0].mxu0
        %1145 = vdwg.mxu0
        %v1146 = vmax.f32 %v1078, 0.0
        %v1147 = vmax.f32 %v1083, 0.0
        %v1148 = vmax.f32 %v1088, 0.0
        %v1149 = vmax.f32 %v1093, 0.0
        %v1150 = vmax.f32 %v1098, 0.0
        %v1151 = vmax.f32 %v1103, 0.0
        %v1152 = vmax.f32 %v1108, 0.0
        %v1153 = vmax.f32 %v1113, 0.0
        %v1154 = vmax.f32 %v1118, 0.0
        %v1155 = vmax.f32 %v1123, 0.0
        %v1156 = vmax.f32 %v1128, 0.0
        %v1157 = vmax.f32 %v1133, 0.0
        %v1158 = vmax.f32 %v1138, 0.0
        %v1159 = vmax.f32 %v1143, 0.0
        %v1160 = vrot.slane %v1146, 7
        %v1161 = vrot.slane %v1147, 7
        %v1162 = vrot.slane %v1148, 7
        %v1163 = vrot.slane %v1149, 7
        %v1164 = vrot.slane %v1150, 7
        %v1165 = vrot.slane %v1151, 7
        %v1166 = vrot.slane %v1152, 7
        %v1167 = vrot.slane %v1153, 7
        %v1168 = vrot.slane %v1154, 7
        %v1169 = vrot.slane %v1155, 7
        %v1170 = vrot.slane %v1156, 7
        %v1171 = vrot.slane %v1157, 7
        %v1172 = vrot.slane %v1158, 7
        %v1173 = vrot.slane %v1159, 7
        %v1174 = vsel %vm818, %v1172, %v1173
        %v1175 = vsel %vm818, %v1171, %v1172
        %v1176 = vsel %vm818, %v1170, %v1171
        %v1177 = vsel %vm818, %v1169, %v1170
        %v1178 = vsel %vm818, %v1168, %v1169
        %v1179 = vsel %vm818, %v1167, %v1168
        %v1180 = vsel %vm818, %v1166, %v1167
        %v1181 = vsel %vm818, %v1165, %v1166
        %v1182 = vsel %vm818, %v1164, %v1165
        %v1183 = vsel %vm818, %v1163, %v1164
        %v1184 = vsel %vm818, %v1162, %v1163
        %v1185 = vsel %vm818, %v1161, %v1162
        %v1186 = vsel %vm818, %v1160, %v1161
        %v1187 = vsel %vm818, %v1173, %v1160
        %v1188 = vsel %vm861, %v1187, 0.0
        %v1189 = vsel %vm862, %v1186, 0.0
        %v1190 = vsel %vm863, %v1185, 0.0
        %v1191 = vsel %vm864, %v1184, 0.0
        %v1192 = vsel %vm865, %v1183, 0.0
        %v1193 = vsel %vm866, %v1182, 0.0
        %v1194 = vsel %vm867, %v1181, 0.0
        %v1195 = vsel %vm868, %v1180, 0.0
        %v1196 = vsel %vm869, %v1179, 0.0
        %v1197 = vsel %vm870, %v1178, 0.0
        %v1198 = vsel %vm871, %v1177, 0.0
        %v1199 = vsel %vm872, %v1176, 0.0
        %v1200 = vsel %vm873, %v1175, 0.0
        %v1201 = vsel %vm874, %v1174, 0.0
        %1216 = vrot.lane.b32.xlu0 %v1146, 8
        %v1217 = vpop.permute.xlu0 %1216
        %1218 = vrot.lane.b32.xlu0 %v1147, 8
        %v1219 = vpop.permute.xlu0 %1218
        %1220 = vrot.lane.b32.xlu0 %v1148, 8
        %v1221 = vpop.permute.xlu0 %1220
        %1222 = vrot.lane.b32.xlu0 %v1149, 8
        %v1223 = vpop.permute.xlu0 %1222
        %1224 = vrot.lane.b32.xlu0 %v1150, 8
        %v1225 = vpop.permute.xlu0 %1224
        %1226 = vrot.lane.b32.xlu0 %v1151, 8
        %v1227 = vpop.permute.xlu0 %1226
        %1228 = vrot.lane.b32.xlu0 %v1152, 8
        %v1229 = vpop.permute.xlu0 %1228
        %1230 = vrot.lane.b32.xlu0 %v1153, 8
        %v1231 = vpop.permute.xlu0 %1230
        %1232 = vrot.lane.b32.xlu0 %v1154, 8
        %v1233 = vpop.permute.xlu0 %1232
        %1234 = vrot.lane.b32.xlu0 %v1155, 8
        %v1235 = vpop.permute.xlu0 %1234
        %1236 = vrot.lane.b32.xlu0 %v1156, 8
        %v1237 = vpop.permute.xlu0 %1236
        %1238 = vrot.lane.b32.xlu0 %v1157, 8
        %v1239 = vpop.permute.xlu0 %1238
        %1240 = vrot.lane.b32.xlu0 %v1158, 8
        %v1241 = vpop.permute.xlu0 %1240
        %1242 = vrot.lane.b32.xlu0 %v1159, 8
        %v1243 = vpop.permute.xlu0 %1242
        %v1258 = vsel %vm968, %v1188, %v1217
        %v1259 = vsel %vm968, %v1189, %v1219
        %v1260 = vsel %vm968, %v1190, %v1221
        %v1261 = vsel %vm968, %v1191, %v1223
        %v1262 = vsel %vm968, %v1192, %v1225
        %v1263 = vsel %vm968, %v1193, %v1227
        %v1264 = vsel %vm968, %v1194, %v1229
        %v1265 = vsel %vm968, %v1195, %v1231
        %v1266 = vsel %vm968, %v1196, %v1233
        %v1267 = vsel %vm968, %v1197, %v1235
        %v1268 = vsel %vm968, %v1198, %v1237
        %v1269 = vsel %vm968, %v1199, %v1239
        %v1270 = vsel %vm968, %v1200, %v1241
        %v1271 = vsel %vm968, %v1201, %v1243
        %v1272 = vld [vmem:[%s3] sm:$0xff]
        %v1273 = vld [vmem:[%s3 + $0x8] sm:$0xff]
        %v1274 = vld [vmem:[%s4] sm:$0x1]
        %v1276 = vlaneseq
        %v1277 = vshrl.u32 %v1276, 7
        %v1278 = vsub.s32 0, %v1277
        %v1279 = vrot.slane %v1274, %v1278
        %vm1281 = vcmask 130048
        %v1283 = vsel %vm1281, %v1258, 0
        %v1286 = vsel %vm1281, %v1259, 0
        %v1289 = vsel %vm1281, %v1260, 0
        %v1292 = vsel %vm1281, %v1261, 0
        %v1295 = vsel %vm1281, %v1262, 0
        %v1298 = vsel %vm1281, %v1263, 0
        %v1301 = vsel %vm1281, %v1264, 0
        %v1304 = vsel %vm1281, %v1265, 0
        %v1307 = vsel %vm1281, %v1266, 0
        %v1310 = vsel %vm1281, %v1267, 0
        %v1313 = vsel %vm1281, %v1268, 0
        %v1316 = vsel %vm1281, %v1269, 0
        %v1319 = vsel %vm1281, %v1270, 0
        %v1322 = vsel %vm1281, %v1271, 0
        %1324 = vmatprep.subr.mxu0 0.0
        %1325 = vmatpush1.msra.mxu0 %v1272
        %1326 = vmatprep.subr.mxu0 0.0
        %1327 = vmatpush1.msra.mxu0 %v1273
        %1328 = vmatprep.subr.mxu0 0.0
        %1329 = vmatpush1.msra.mxu0 0.0
        %1330 = vmatprep.subr.mxu0 0.0
        %1331 = vmatpush1.msra.mxu0 0.0
        %1332 = vmatprep.subr.mxu0 0.0
        %1333 = vmatpush1.msra.mxu0 0.0
        %1334 = vmatprep.subr.mxu0 0.0
        %1335 = vmatpush1.msra.mxu0 0.0
        %1336 = vmatprep.subr.mxu0 0.0
        %1337 = vmatpush1.msra.mxu0 0.0
        %1338 = vmatprep.subr.mxu0 0.0
        %1339 = vmatpush1.msra.mxu0 0.0
        %1340 = vmatprep.subr.mxu0 0.0
        %1341 = vmatpush1.msra.mxu0 0.0
        %1342 = vmatprep.subr.mxu0 0.0
        %1343 = vmatpush1.msra.mxu0 0.0
        %1344 = vmatprep.subr.mxu0 0.0
        %1345 = vmatpush1.msra.mxu0 0.0
        %1346 = vmatprep.subr.mxu0 0.0
        %1347 = vmatpush1.msra.mxu0 0.0
        %1348 = vmatprep.subr.mxu0 0.0
        %1349 = vmatpush1.msra.mxu0 0.0
        %1350 = vmatprep.subr.mxu0 0.0
        %1351 = vmatpush1.msra.mxu0 0.0
        %1352 = vmatprep.subr.mxu0 0.0
        %1353 = vmatpush1.msra.mxu0 0.0
        %1354 = vmatprep.subr.mxu0 0.0
        %1355 = vmatpush1.msra.mxu0 0.0
        %1356 = vmatprep.subr.mxu0 0.0
        %1357 = vmatpush1.msra.mxu0 0.0
        %1358 = vmatprep.subr.mxu0 0.0
        %1359 = vmatpush1.msra.mxu0 0.0
        %1360 = vmatprep.subr.mxu0 0.0
        %1361 = vmatpush1.msra.mxu0 0.0
        %1362 = vmatprep.subr.mxu0 0.0
        %1363 = vmatpush1.msra.mxu0 0.0
        %1364 = vmatprep.subr.mxu0 0.0
        %1365 = vmatpush1.msra.mxu0 0.0
        %1366 = vmatprep.subr.mxu0 0.0
        %1367 = vmatpush1.msra.mxu0 0.0
        %1368 = vmatprep.subr.mxu0 0.0
        %1369 = vmatpush1.msra.mxu0 0.0
        %1370 = vmatprep.subr.mxu0 0.0
        %1371 = vmatpush1.msra.mxu0 0.0
        %1372 = vmatprep.subr.mxu0 0.0
        %1373 = vmatpush1.msra.mxu0 0.0
        %1374 = vmatprep.subr.mxu0 0.0
        %1375 = vmatpush1.msra.mxu0 0.0
        %1376 = vmatprep.subr.mxu0 0.0
        %1377 = vmatpush1.msra.mxu0 0.0
        %1378 = vmatprep.subr.mxu0 0.0
        %1379 = vmatpush1.msra.mxu0 0.0
        %1380 = vmatprep.subr.mxu0 0.0
        %1381 = vmatpush1.msra.mxu0 0.0
        %1382 = vmatprep.subr.mxu0 0.0
        %1383 = vmatpush1.msra.mxu0 0.0
        %1384 = vmatprep.subr.mxu0 0.0
        %1385 = vmatpush1.msra.mxu0 0.0
        %1386 = vmatprep.subr.mxu0 0.0
        %1387 = vmatpush1.msra.mxu0 0.0
        %1388 = vmatprep.mubr.f32.mxu0 0.0
        %1389 = vmatmul.mubr.f32.gmra.mrb[0].mxu0 %v1283
        %v1390 = vpop.f32.mrb[0].mxu0
        %v1391 = vadd.f32 %v1279, %v1390
        %v1392 = vpop.f32.mrb[0].mxu0
        %1393 = vmatprep.mubr.f32.mxu0 0.0
        %1394 = vmatmul.mubr.f32.gmra.mrb[0].mxu0 %v1286
        %v1395 = vpop.f32.mrb[0].mxu0
        %v1396 = vadd.f32 %v1279, %v1395
        %v1397 = vpop.f32.mrb[0].mxu0
        %1398 = vmatprep.mubr.f32.mxu0 0.0
        %1399 = vmatmul.mubr.f32.gmra.mrb[0].mxu0 %v1289
        %v1400 = vpop.f32.mrb[0].mxu0
        %v1401 = vadd.f32 %v1279, %v1400
        %v1402 = vpop.f32.mrb[0].mxu0
        %1403 = vmatprep.mubr.f32.mxu0 0.0
        %1404 = vmatmul.mubr.f32.gmra.mrb[0].mxu0 %v1292
        %v1405 = vpop.f32.mrb[0].mxu0
        %v1406 = vadd.f32 %v1279, %v1405
        %v1407 = vpop.f32.mrb[0].mxu0
        %1408 = vmatprep.mubr.f32.mxu0 0.0
        %1409 = vmatmul.mubr.f32.gmra.mrb[0].mxu0 %v1295
        %v1410 = vpop.f32.mrb[0].mxu0
        %v1411 = vadd.f32 %v1279, %v1410
        %v1412 = vpop.f32.mrb[0].mxu0
        %1413 = vmatprep.mubr.f32.mxu0 0.0
        %1414 = vmatmul.mubr.f32.gmra.mrb[0].mxu0 %v1298
        %v1415 = vpop.f32.mrb[0].mxu0
        %v1416 = vadd.f32 %v1279, %v1415
        %v1417 = vpop.f32.mrb[0].mxu0
        %1418 = vmatprep.mubr.f32.mxu0 0.0
        %1419 = vmatmul.mubr.f32.gmra.mrb[0].mxu0 %v1301
        %v1420 = vpop.f32.mrb[0].mxu0
        %v1421 = vadd.f32 %v1279, %v1420
        %v1422 = vpop.f32.mrb[0].mxu0
        %1423 = vmatprep.mubr.f32.mxu0 0.0
        %1424 = vmatmul.mubr.f32.gmra.mrb[0].mxu0 %v1304
        %v1425 = vpop.f32.mrb[0].mxu0
        %v1426 = vadd.f32 %v1279, %v1425
        %v1427 = vpop.f32.mrb[0].mxu0
        %1428 = vmatprep.mubr.f32.mxu0 0.0
        %1429 = vmatmul.mubr.f32.gmra.mrb[0].mxu0 %v1307
        %v1430 = vpop.f32.mrb[0].mxu0
        %v1431 = vadd.f32 %v1279, %v1430
        %v1432 = vpop.f32.mrb[0].mxu0
        %1433 = vmatprep.mubr.f32.mxu0 0.0
        %1434 = vmatmul.mubr.f32.gmra.mrb[0].mxu0 %v1310
        %v1435 = vpop.f32.mrb[0].mxu0
        %v1436 = vadd.f32 %v1279, %v1435
        %v1437 = vpop.f32.mrb[0].mxu0
        %1438 = vmatprep.mubr.f32.mxu0 0.0
        %1439 = vmatmul.mubr.f32.gmra.mrb[0].mxu0 %v1313
        %v1440 = vpop.f32.mrb[0].mxu0
        %v1441 = vadd.f32 %v1279, %v1440
        %v1442 = vpop.f32.mrb[0].mxu0
        %1443 = vmatprep.mubr.f32.mxu0 0.0
        %1444 = vmatmul.mubr.f32.gmra.mrb[0].mxu0 %v1316
        %v1445 = vpop.f32.mrb[0].mxu0
        %v1446 = vadd.f32 %v1279, %v1445
        %v1447 = vpop.f32.mrb[0].mxu0
        %1448 = vmatprep.mubr.f32.mxu0 0.0
        %1449 = vmatmul.mubr.f32.gmra.mrb[0].mxu0 %v1319
        %v1450 = vpop.f32.mrb[0].mxu0
        %v1451 = vadd.f32 %v1279, %v1450
        %v1452 = vpop.f32.mrb[0].mxu0
        %1453 = vmatprep.mubr.f32.mxu0 0.0
        %1454 = vmatmul.mubr.f32.gmra.mrb[0].mxu0 %v1322
        %v1455 = vpop.f32.mrb[0].mxu0
        %v1456 = vadd.f32 %v1279, %v1455
        %v1457 = vpop.f32.mrb[0].mxu0
        %1458 = vdwg.mxu0
        %v1459 = vmax.f32 %v1391, 0.0
        %v1460 = vmax.f32 %v1396, 0.0
        %v1461 = vmax.f32 %v1401, 0.0
        %v1462 = vmax.f32 %v1406, 0.0
        %v1463 = vmax.f32 %v1411, 0.0
        %v1464 = vmax.f32 %v1416, 0.0
        %v1465 = vmax.f32 %v1421, 0.0
        %v1466 = vmax.f32 %v1426, 0.0
        %v1467 = vmax.f32 %v1431, 0.0
        %v1468 = vmax.f32 %v1436, 0.0
        %v1469 = vmax.f32 %v1441, 0.0
        %v1470 = vmax.f32 %v1446, 0.0
        %v1471 = vmax.f32 %v1451, 0.0
        %v1472 = vmax.f32 %v1456, 0.0
        %v1473 = vld [vmem:[%s5] sm:$0xf]
        %v1474 = vld [vmem:[%s6] sm:$0x1]
        %v1476 = vlaneseq
        %v1477 = vshrl.u32 %v1476, 7
        %v1478 = vsub.s32 0, %v1477
        %v1479 = vrot.slane %v1474, %v1478
        %v1481 = vsel %vm945, %v607, 0
        %v1483 = vsel %vm945, %v608, 0
        %v1485 = vsel %vm945, %v609, 0
        %v1487 = vsel %vm945, %v610, 0
        %v1489 = vsel %vm945, %v611, 0
        %v1491 = vsel %vm945, %v612, 0
        %v1493 = vsel %vm945, %v613, 0
        %v1495 = vsel %vm945, %v614, 0
        %v1497 = vsel %vm945, %v615, 0
        %v1499 = vsel %vm945, %v616, 0
        %v1501 = vsel %vm945, %v617, 0
        %v1503 = vsel %vm945, %v618, 0
        %v1505 = vsel %vm945, %v619, 0
        %v1507 = vsel %vm945, %v620, 0
        %vm1509 = vcmask 1043456
        %v1511 = vsel %vm1509, %v1473, 0
        %1513 = vmatprep.subr.mxu0 0.0
        %1514 = vmatpush1.msra.mxu0 %v1511
        %1515 = vmatprep.subr.mxu0 0.0
        %1516 = vmatpush1.msra.mxu0 0.0
        %1517 = vmatprep.subr.mxu0 0.0
        %1518 = vmatpush1.msra.mxu0 0.0
        %1519 = vmatprep.subr.mxu0 0.0
        %1520 = vmatpush1.msra.mxu0 0.0
        %1521 = vmatprep.subr.mxu0 0.0
        %1522 = vmatpush1.msra.mxu0 0.0
        %1523 = vmatprep.subr.mxu0 0.0
        %1524 = vmatpush1.msra.mxu0 0.0
        %1525 = vmatprep.subr.mxu0 0.0
        %1526 = vmatpush1.msra.mxu0 0.0
        %1527 = vmatprep.subr.mxu0 0.0
        %1528 = vmatpush1.msra.mxu0 0.0
        %1529 = vmatprep.subr.mxu0 0.0
        %1530 = vmatpush1.msra.mxu0 0.0
        %1531 = vmatprep.subr.mxu0 0.0
        %1532 = vmatpush1.msra.mxu0 0.0
        %1533 = vmatprep.subr.mxu0 0.0
        %1534 = vmatpush1.msra.mxu0 0.0
        %1535 = vmatprep.subr.mxu0 0.0
        %1536 = vmatpush1.msra.mxu0 0.0
        %1537 = vmatprep.subr.mxu0 0.0
        %1538 = vmatpush1.msra.mxu0 0.0
        %1539 = vmatprep.subr.mxu0 0.0
        %1540 = vmatpush1.msra.mxu0 0.0
        %1541 = vmatprep.subr.mxu0 0.0
        %1542 = vmatpush1.msra.mxu0 0.0
        %1543 = vmatprep.subr.mxu0 0.0
        %1544 = vmatpush1.msra.mxu0 0.0
        %1545 = vmatprep.subr.mxu0 0.0
        %1546 = vmatpush1.msra.mxu0 0.0
        %1547 = vmatprep.subr.mxu0 0.0
        %1548 = vmatpush1.msra.mxu0 0.0
        %1549 = vmatprep.subr.mxu0 0.0
        %1550 = vmatpush1.msra.mxu0 0.0
        %1551 = vmatprep.subr.mxu0 0.0
        %1552 = vmatpush1.msra.mxu0 0.0
        %1553 = vmatprep.subr.mxu0 0.0
        %1554 = vmatpush1.msra.mxu0 0.0
        %1555 = vmatprep.subr.mxu0 0.0
        %1556 = vmatpush1.msra.mxu0 0.0
        %1557 = vmatprep.subr.mxu0 0.0
        %1558 = vmatpush1.msra.mxu0 0.0
        %1559 = vmatprep.subr.mxu0 0.0
        %1560 = vmatpush1.msra.mxu0 0.0
        %1561 = vmatprep.subr.mxu0 0.0
        %1562 = vmatpush1.msra.mxu0 0.0
        %1563 = vmatprep.subr.mxu0 0.0
        %1564 = vmatpush1.msra.mxu0 0.0
        %1565 = vmatprep.subr.mxu0 0.0
        %1566 = vmatpush1.msra.mxu0 0.0
        %1567 = vmatprep.subr.mxu0 0.0
        %1568 = vmatpush1.msra.mxu0 0.0
        %1569 = vmatprep.subr.mxu0 0.0
        %1570 = vmatpush1.msra.mxu0 0.0
        %1571 = vmatprep.subr.mxu0 0.0
        %1572 = vmatpush1.msra.mxu0 0.0
        %1573 = vmatprep.subr.mxu0 0.0
        %1574 = vmatpush1.msra.mxu0 0.0
        %1575 = vmatprep.subr.mxu0 0.0
        %1576 = vmatpush1.msra.mxu0 0.0
        %1577 = vmatprep.mubr.f32.mxu0 0.0
        %1578 = vmatmul.mubr.f32.gmra.mrb[0].mxu0 %v1481
        %v1579 = vpop.f32.mrb[0].mxu0
        %v1580 = vadd.f32 %v1479, %v1579
        %v1581 = vpop.f32.mrb[0].mxu0
        %1582 = vmatprep.mubr.f32.mxu0 0.0
        %1583 = vmatmul.mubr.f32.gmra.mrb[0].mxu0 %v1483
        %v1584 = vpop.f32.mrb[0].mxu0
        %v1585 = vadd.f32 %v1479, %v1584
        %v1586 = vpop.f32.mrb[0].mxu0
        %1587 = vmatprep.mubr.f32.mxu0 0.0
        %1588 = vmatmul.mubr.f32.gmra.mrb[0].mxu0 %v1485
        %v1589 = vpop.f32.mrb[0].mxu0
        %v1590 = vadd.f32 %v1479, %v1589
        %v1591 = vpop.f32.mrb[0].mxu0
        %1592 = vmatprep.mubr.f32.mxu0 0.0
        %1593 = vmatmul.mubr.f32.gmra.mrb[0].mxu0 %v1487
        %v1594 = vpop.f32.mrb[0].mxu0
        %v1595 = vadd.f32 %v1479, %v1594
        %v1596 = vpop.f32.mrb[0].mxu0
        %1597 = vmatprep.mubr.f32.mxu0 0.0
        %1598 = vmatmul.mubr.f32.gmra.mrb[0].mxu0 %v1489
        %v1599 = vpop.f32.mrb[0].mxu0
        %v1600 = vadd.f32 %v1479, %v1599
        %v1601 = vpop.f32.mrb[0].mxu0
        %1602 = vmatprep.mubr.f32.mxu0 0.0
        %1603 = vmatmul.mubr.f32.gmra.mrb[0].mxu0 %v1491
        %v1604 = vpop.f32.mrb[0].mxu0
        %v1605 = vadd.f32 %v1479, %v1604
        %v1606 = vpop.f32.mrb[0].mxu0
        %1607 = vmatprep.mubr.f32.mxu0 0.0
        %1608 = vmatmul.mubr.f32.gmra.mrb[0].mxu0 %v1493
        %v1609 = vpop.f32.mrb[0].mxu0
        %v1610 = vadd.f32 %v1479, %v1609
        %v1611 = vpop.f32.mrb[0].mxu0
        %1612 = vmatprep.mubr.f32.mxu0 0.0
        %1613 = vmatmul.mubr.f32.gmra.mrb[0].mxu0 %v1495
        %v1614 = vpop.f32.mrb[0].mxu0
        %v1615 = vadd.f32 %v1479, %v1614
        %v1616 = vpop.f32.mrb[0].mxu0
        %1617 = vmatprep.mubr.f32.mxu0 0.0
        %1618 = vmatmul.mubr.f32.gmra.mrb[0].mxu0 %v1497
        %v1619 = vpop.f32.mrb[0].mxu0
        %v1620 = vadd.f32 %v1479, %v1619
        %v1621 = vpop.f32.mrb[0].mxu0
        %1622 = vmatprep.mubr.f32.mxu0 0.0
        %1623 = vmatmul.mubr.f32.gmra.mrb[0].mxu0 %v1499
        %v1624 = vpop.f32.mrb[0].mxu0
        %v1625 = vadd.f32 %v1479, %v1624
        %v1626 = vpop.f32.mrb[0].mxu0
        %1627 = vmatprep.mubr.f32.mxu0 0.0
        %1628 = vmatmul.mubr.f32.gmra.mrb[0].mxu0 %v1501
        %v1629 = vpop.f32.mrb[0].mxu0
        %v1630 = vadd.f32 %v1479, %v1629
        %v1631 = vpop.f32.mrb[0].mxu0
        %1632 = vmatprep.mubr.f32.mxu0 0.0
        %1633 = vmatmul.mubr.f32.gmra.mrb[0].mxu0 %v1503
        %v1634 = vpop.f32.mrb[0].mxu0
        %v1635 = vadd.f32 %v1479, %v1634
        %v1636 = vpop.f32.mrb[0].mxu0
        %1637 = vmatprep.mubr.f32.mxu0 0.0
        %1638 = vmatmul.mubr.f32.gmra.mrb[0].mxu0 %v1505
        %v1639 = vpop.f32.mrb[0].mxu0
        %v1640 = vadd.f32 %v1479, %v1639
        %v1641 = vpop.f32.mrb[0].mxu0
        %1642 = vmatprep.mubr.f32.mxu0 0.0
        %1643 = vmatmul.mubr.f32.gmra.mrb[0].mxu0 %v1507
        %v1644 = vpop.f32.mrb[0].mxu0
        %v1645 = vadd.f32 %v1479, %v1644
        %v1646 = vpop.f32.mrb[0].mxu0
        %1647 = vdwg.mxu0
        %v1648 = vadd.f32 %v1459, %v1580
        %v1649 = vadd.f32 %v1460, %v1585
        %v1650 = vadd.f32 %v1461, %v1590
        %v1651 = vadd.f32 %v1462, %v1595
        %v1652 = vadd.f32 %v1463, %v1600
        %v1653 = vadd.f32 %v1464, %v1605
        %v1654 = vadd.f32 %v1465, %v1610
        %v1655 = vadd.f32 %v1466, %v1615
        %v1656 = vadd.f32 %v1467, %v1620
        %v1657 = vadd.f32 %v1468, %v1625
        %v1658 = vadd.f32 %v1469, %v1630
        %v1659 = vadd.f32 %v1470, %v1635
        %v1660 = vadd.f32 %v1471, %v1640
        %v1661 = vadd.f32 %v1472, %v1645
        %v1662 = vmax.f32 %v1648, 0.0
        %v1663 = vmax.f32 %v1649, 0.0
        %v1664 = vmax.f32 %v1650, 0.0
        %v1665 = vmax.f32 %v1651, 0.0
        %v1666 = vmax.f32 %v1652, 0.0
        %v1667 = vmax.f32 %v1653, 0.0
        %v1668 = vmax.f32 %v1654, 0.0
        %v1669 = vmax.f32 %v1655, 0.0
        %v1670 = vmax.f32 %v1656, 0.0
        %v1671 = vmax.f32 %v1657, 0.0
        %v1672 = vmax.f32 %v1658, 0.0
        %v1673 = vmax.f32 %v1659, 0.0
        %v1674 = vmax.f32 %v1660, 0.0
        %v1675 = vmax.f32 %v1661, 0.0
        %v1676 = vrot.slane %v1662, 6
        %v1677 = vrot.slane %v1663, 6
        %v1678 = vrot.slane %v1664, 6
        %v1679 = vrot.slane %v1665, 6
        %v1680 = vrot.slane %v1666, 6
        %v1681 = vrot.slane %v1667, 6
        %v1682 = vrot.slane %v1668, 6
        %v1683 = vrot.slane %v1669, 6
        %v1684 = vrot.slane %v1670, 6
        %v1685 = vrot.slane %v1671, 6
        %v1686 = vrot.slane %v1672, 6
        %v1687 = vrot.slane %v1673, 6
        %v1688 = vrot.slane %v1674, 6
        %v1689 = vrot.slane %v1675, 6
        %vm1690 = vcmp.lt.s32.totalorder %v622, 2
        %v1691 = vsel %vm1690, %v1688, %v1689
        %v1692 = vsel %vm1690, %v1687, %v1688
        %v1693 = vsel %vm1690, %v1686, %v1687
        %v1694 = vsel %vm1690, %v1685, %v1686
        %v1695 = vsel %vm1690, %v1684, %v1685
        %v1696 = vsel %vm1690, %v1683, %v1684
        %v1697 = vsel %vm1690, %v1682, %v1683
        %v1698 = vsel %vm1690, %v1681, %v1682
        %v1699 = vsel %vm1690, %v1680, %v1681
        %v1700 = vsel %vm1690, %v1679, %v1680
        %v1701 = vsel %vm1690, %v1678, %v1679
        %v1702 = vsel %vm1690, %v1677, %v1678
        %v1703 = vsel %vm1690, %v1676, %v1677
        %v1704 = vsel %vm1690, %v1689, %v1676
        %vm1705 = vcmp.ge.s32.totalorder %v790, 2
        %vm1706 = vcmp.ge.s32.totalorder %v791, 2
        %vm1707 = vcmp.ge.s32.totalorder %v792, 2
        %vm1708 = vcmp.ge.s32.totalorder %v793, 2
        %vm1709 = vcmp.ge.s32.totalorder %v794, 2
        %vm1710 = vcmp.ge.s32.totalorder %v795, 2
        %vm1711 = vcmp.ge.s32.totalorder %v796, 2
        %vm1712 = vcmp.ge.s32.totalorder %v797, 2
        %vm1713 = vcmp.ge.s32.totalorder %v798, 2
        %vm1714 = vcmp.ge.s32.totalorder %v799, 2
        %vm1715 = vcmp.ge.s32.totalorder %v800, 2
        %vm1716 = vcmp.ge.s32.totalorder %v801, 2
        %vm1717 = vcmp.ge.s32.totalorder %v802, 2
        %vm1718 = vcmp.ge.s32.totalorder %v803, 2
        %v1719 = vsel %vm1705, 1, 0
        %v1720 = vsel %vm1706, 1, 0
        %v1721 = vsel %vm1707, 1, 0
        %v1722 = vsel %vm1708, 1, 0
        %v1723 = vsel %vm1709, 1, 0
        %v1724 = vsel %vm1710, 1, 0
        %v1725 = vsel %vm1711, 1, 0
        %v1726 = vsel %vm1712, 1, 0
        %v1727 = vsel %vm1713, 1, 0
        %v1728 = vsel %vm1714, 1, 0
        %v1729 = vsel %vm1715, 1, 0
        %v1730 = vsel %vm1716, 1, 0
        %v1731 = vsel %vm1717, 1, 0
        %v1732 = vsel %vm1718, 1, 0
        %vm1733 = vcmp.eq.s32.totalorder %v1719, 1
        %vm1734 = vcmp.eq.s32.totalorder %v1720, 1
        %vm1735 = vcmp.eq.s32.totalorder %v1721, 1
        %vm1736 = vcmp.eq.s32.totalorder %v1722, 1
        %vm1737 = vcmp.eq.s32.totalorder %v1723, 1
        %vm1738 = vcmp.eq.s32.totalorder %v1724, 1
        %vm1739 = vcmp.eq.s32.totalorder %v1725, 1
        %vm1740 = vcmp.eq.s32.totalorder %v1726, 1
        %vm1741 = vcmp.eq.s32.totalorder %v1727, 1
        %vm1742 = vcmp.eq.s32.totalorder %v1728, 1
        %vm1743 = vcmp.eq.s32.totalorder %v1729, 1
        %vm1744 = vcmp.eq.s32.totalorder %v1730, 1
        %vm1745 = vcmp.eq.s32.totalorder %v1731, 1
        %vm1746 = vcmp.eq.s32.totalorder %v1732, 1
        %v1747 = vsel %vm1733, %v1704, 0.0
        %v1748 = vsel %vm1734, %v1703, 0.0
        %v1749 = vsel %vm1735, %v1702, 0.0
        %v1750 = vsel %vm1736, %v1701, 0.0
        %v1751 = vsel %vm1737, %v1700, 0.0
        %v1752 = vsel %vm1738, %v1699, 0.0
        %v1753 = vsel %vm1739, %v1698, 0.0
        %v1754 = vsel %vm1740, %v1697, 0.0
        %v1755 = vsel %vm1741, %v1696, 0.0
        %v1756 = vsel %vm1742, %v1695, 0.0
        %v1757 = vsel %vm1743, %v1694, 0.0
        %v1758 = vsel %vm1744, %v1693, 0.0
        %v1759 = vsel %vm1745, %v1692, 0.0
        %v1760 = vsel %vm1746, %v1691, 0.0
        %1775 = vrot.lane.b32.xlu0 %v1662, 8
        %v1776 = vpop.permute.xlu0 %1775
        %1777 = vrot.lane.b32.xlu0 %v1663, 8
        %v1778 = vpop.permute.xlu0 %1777
        %1779 = vrot.lane.b32.xlu0 %v1664, 8
        %v1780 = vpop.permute.xlu0 %1779
        %1781 = vrot.lane.b32.xlu0 %v1665, 8
        %v1782 = vpop.permute.xlu0 %1781
        %1783 = vrot.lane.b32.xlu0 %v1666, 8
        %v1784 = vpop.permute.xlu0 %1783
        %1785 = vrot.lane.b32.xlu0 %v1667, 8
        %v1786 = vpop.permute.xlu0 %1785
        %1787 = vrot.lane.b32.xlu0 %v1668, 8
        %v1788 = vpop.permute.xlu0 %1787
        %1789 = vrot.lane.b32.xlu0 %v1669, 8
        %v1790 = vpop.permute.xlu0 %1789
        %1791 = vrot.lane.b32.xlu0 %v1670, 8
        %v1792 = vpop.permute.xlu0 %1791
        %1793 = vrot.lane.b32.xlu0 %v1671, 8
        %v1794 = vpop.permute.xlu0 %1793
        %1795 = vrot.lane.b32.xlu0 %v1672, 8
        %v1796 = vpop.permute.xlu0 %1795
        %1797 = vrot.lane.b32.xlu0 %v1673, 8
        %v1798 = vpop.permute.xlu0 %1797
        %1799 = vrot.lane.b32.xlu0 %v1674, 8
        %v1800 = vpop.permute.xlu0 %1799
        %1801 = vrot.lane.b32.xlu0 %v1675, 8
        %v1802 = vpop.permute.xlu0 %1801
        %v1817 = vsel %vm968, %v1747, %v1776
        %v1818 = vsel %vm968, %v1748, %v1778
        %v1819 = vsel %vm968, %v1749, %v1780
        %v1820 = vsel %vm968, %v1750, %v1782
        %v1821 = vsel %vm968, %v1751, %v1784
        %v1822 = vsel %vm968, %v1752, %v1786
        %v1823 = vsel %vm968, %v1753, %v1788
        %v1824 = vsel %vm968, %v1754, %v1790
        %v1825 = vsel %vm968, %v1755, %v1792
        %v1826 = vsel %vm968, %v1756, %v1794
        %v1827 = vsel %vm968, %v1757, %v1796
        %v1828 = vsel %vm968, %v1758, %v1798
        %v1829 = vsel %vm968, %v1759, %v1800
        %v1830 = vsel %vm968, %v1760, %v1802
        %v1831 = vld [vmem:[%s7] sm:$0xff]
        %v1832 = vld [vmem:[%s7 + $0x8] sm:$0xff]
        %v1833 = vld [vmem:[%s8] sm:$0x1]
        %v1835 = vlaneseq
        %v1836 = vshrl.u32 %v1835, 7
        %v1837 = vsub.s32 0, %v1836
        %v1838 = vrot.slane %v1833, %v1837
        %v1841 = vsel %vm1281, %v1817, 0
        %v1844 = vsel %vm1281, %v1818, 0
        %v1847 = vsel %vm1281, %v1819, 0
        %v1850 = vsel %vm1281, %v1820, 0
        %v1853 = vsel %vm1281, %v1821, 0
        %v1856 = vsel %vm1281, %v1822, 0
        %v1859 = vsel %vm1281, %v1823, 0
        %v1862 = vsel %vm1281, %v1824, 0
        %v1865 = vsel %vm1281, %v1825, 0
        %v1868 = vsel %vm1281, %v1826, 0
        %v1871 = vsel %vm1281, %v1827, 0
        %v1874 = vsel %vm1281, %v1828, 0
        %v1877 = vsel %vm1281, %v1829, 0
        %v1880 = vsel %vm1281, %v1830, 0
        %1882 = vmatprep.subr.mxu0 0.0
        %1883 = vmatpush1.msra.mxu0 %v1831
        %1884 = vmatprep.subr.mxu0 0.0
        %1885 = vmatpush1.msra.mxu0 %v1832
        %1886 = vmatprep.subr.mxu0 0.0
        %1887 = vmatpush1.msra.mxu0 0.0
        %1888 = vmatprep.subr.mxu0 0.0
        %1889 = vmatpush1.msra.mxu0 0.0
        %1890 = vmatprep.subr.mxu0 0.0
        %1891 = vmatpush1.msra.mxu0 0.0
        %1892 = vmatprep.subr.mxu0 0.0
        %1893 = vmatpush1.msra.mxu0 0.0
        %1894 = vmatprep.subr.mxu0 0.0
        %1895 = vmatpush1.msra.mxu0 0.0
        %1896 = vmatprep.subr.mxu0 0.0
        %1897 = vmatpush1.msra.mxu0 0.0
        %1898 = vmatprep.subr.mxu0 0.0
        %1899 = vmatpush1.msra.mxu0 0.0
        %1900 = vmatprep.subr.mxu0 0.0
        %1901 = vmatpush1.msra.mxu0 0.0
        %1902 = vmatprep.subr.mxu0 0.0
        %1903 = vmatpush1.msra.mxu0 0.0
        %1904 = vmatprep.subr.mxu0 0.0
        %1905 = vmatpush1.msra.mxu0 0.0
        %1906 = vmatprep.subr.mxu0 0.0
        %1907 = vmatpush1.msra.mxu0 0.0
        %1908 = vmatprep.subr.mxu0 0.0
        %1909 = vmatpush1.msra.mxu0 0.0
        %1910 = vmatprep.subr.mxu0 0.0
        %1911 = vmatpush1.msra.mxu0 0.0
        %1912 = vmatprep.subr.mxu0 0.0
        %1913 = vmatpush1.msra.mxu0 0.0
        %1914 = vmatprep.subr.mxu0 0.0
        %1915 = vmatpush1.msra.mxu0 0.0
        %1916 = vmatprep.subr.mxu0 0.0
        %1917 = vmatpush1.msra.mxu0 0.0
        %1918 = vmatprep.subr.mxu0 0.0
        %1919 = vmatpush1.msra.mxu0 0.0
        %1920 = vmatprep.subr.mxu0 0.0
        %1921 = vmatpush1.msra.mxu0 0.0
        %1922 = vmatprep.subr.mxu0 0.0
        %1923 = vmatpush1.msra.mxu0 0.0
        %1924 = vmatprep.subr.mxu0 0.0
        %1925 = vmatpush1.msra.mxu0 0.0
        %1926 = vmatprep.subr.mxu0 0.0
        %1927 = vmatpush1.msra.mxu0 0.0
        %1928 = vmatprep.subr.mxu0 0.0
        %1929 = vmatpush1.msra.mxu0 0.0
        %1930 = vmatprep.subr.mxu0 0.0
        %1931 = vmatpush1.msra.mxu0 0.0
        %1932 = vmatprep.subr.mxu0 0.0
        %1933 = vmatpush1.msra.mxu0 0.0
        %1934 = vmatprep.subr.mxu0 0.0
        %1935 = vmatpush1.msra.mxu0 0.0
        %1936 = vmatprep.subr.mxu0 0.0
        %1937 = vmatpush1.msra.mxu0 0.0
        %1938 = vmatprep.subr.mxu0 0.0
        %1939 = vmatpush1.msra.mxu0 0.0
        %1940 = vmatprep.subr.mxu0 0.0
        %1941 = vmatpush1.msra.mxu0 0.0
        %1942 = vmatprep.subr.mxu0 0.0
        %1943 = vmatpush1.msra.mxu0 0.0
        %1944 = vmatprep.subr.mxu0 0.0
        %1945 = vmatpush1.msra.mxu0 0.0
        %1946 = vmatprep.mubr.f32.mxu0 0.0
        %1947 = vmatmul.mubr.f32.gmra.mrb[0].mxu0 %v1841
        %v1948 = vpop.f32.mrb[0].mxu0
        %v1949 = vadd.f32 %v1838, %v1948
        %v1950 = vpop.f32.mrb[0].mxu0
        %1951 = vmatprep.mubr.f32.mxu0 0.0
        %1952 = vmatmul.mubr.f32.gmra.mrb[0].mxu0 %v1844
        %v1953 = vpop.f32.mrb[0].mxu0
        %v1954 = vadd.f32 %v1838, %v1953
        %v1955 = vpop.f32.mrb[0].mxu0
        %1956 = vmatprep.mubr.f32.mxu0 0.0
        %1957 = vmatmul.mubr.f32.gmra.mrb[0].mxu0 %v1847
        %v1958 = vpop.f32.mrb[0].mxu0
        %v1959 = vadd.f32 %v1838, %v1958
        %v1960 = vpop.f32.mrb[0].mxu0
        %1961 = vmatprep.mubr.f32.mxu0 0.0
        %1962 = vmatmul.mubr.f32.gmra.mrb[0].mxu0 %v1850
        %v1963 = vpop.f32.mrb[0].mxu0
        %v1964 = vadd.f32 %v1838, %v1963
        %v1965 = vpop.f32.mrb[0].mxu0
        %1966 = vmatprep.mubr.f32.mxu0 0.0
        %1967 = vmatmul.mubr.f32.gmra.mrb[0].mxu0 %v1853
        %v1968 = vpop.f32.mrb[0].mxu0
        %v1969 = vadd.f32 %v1838, %v1968
        %v1970 = vpop.f32.mrb[0].mxu0
        %1971 = vmatprep.mubr.f32.mxu0 0.0
        %1972 = vmatmul.mubr.f32.gmra.mrb[0].mxu0 %v1856
        %v1973 = vpop.f32.mrb[0].mxu0
        %v1974 = vadd.f32 %v1838, %v1973
        %v1975 = vpop.f32.mrb[0].mxu0
        %1976 = vmatprep.mubr.f32.mxu0 0.0
        %1977 = vmatmul.mubr.f32.gmra.mrb[0].mxu0 %v1859
        %v1978 = vpop.f32.mrb[0].mxu0
        %v1979 = vadd.f32 %v1838, %v1978
        %v1980 = vpop.f32.mrb[0].mxu0
        %1981 = vmatprep.mubr.f32.mxu0 0.0
        %1982 = vmatmul.mubr.f32.gmra.mrb[0].mxu0 %v1862
        %v1983 = vpop.f32.mrb[0].mxu0
        %v1984 = vadd.f32 %v1838, %v1983
        %v1985 = vpop.f32.mrb[0].mxu0
        %1986 = vmatprep.mubr.f32.mxu0 0.0
        %1987 = vmatmul.mubr.f32.gmra.mrb[0].mxu0 %v1865
        %v1988 = vpop.f32.mrb[0].mxu0
        %v1989 = vadd.f32 %v1838, %v1988
        %v1990 = vpop.f32.mrb[0].mxu0
        %1991 = vmatprep.mubr.f32.mxu0 0.0
        %1992 = vmatmul.mubr.f32.gmra.mrb[0].mxu0 %v1868
        %v1993 = vpop.f32.mrb[0].mxu0
        %v1994 = vadd.f32 %v1838, %v1993
        %v1995 = vpop.f32.mrb[0].mxu0
        %1996 = vmatprep.mubr.f32.mxu0 0.0
        %1997 = vmatmul.mubr.f32.gmra.mrb[0].mxu0 %v1871
        %v1998 = vpop.f32.mrb[0].mxu0
        %v1999 = vadd.f32 %v1838, %v1998
        %v2000 = vpop.f32.mrb[0].mxu0
        %2001 = vmatprep.mubr.f32.mxu0 0.0
        %2002 = vmatmul.mubr.f32.gmra.mrb[0].mxu0 %v1874
        %v2003 = vpop.f32.mrb[0].mxu0
        %v2004 = vadd.f32 %v1838, %v2003
        %v2005 = vpop.f32.mrb[0].mxu0
        %2006 = vmatprep.mubr.f32.mxu0 0.0
        %2007 = vmatmul.mubr.f32.gmra.mrb[0].mxu0 %v1877
        %v2008 = vpop.f32.mrb[0].mxu0
        %v2009 = vadd.f32 %v1838, %v2008
        %v2010 = vpop.f32.mrb[0].mxu0
        %2011 = vmatprep.mubr.f32.mxu0 0.0
        %2012 = vmatmul.mubr.f32.gmra.mrb[0].mxu0 %v1880
        %v2013 = vpop.f32.mrb[0].mxu0
        %v2014 = vadd.f32 %v1838, %v2013
        %v2015 = vpop.f32.mrb[0].mxu0
        %2016 = vdwg.mxu0
        %v2017 = vmax.f32 %v1949, 0.0
        %v2018 = vmax.f32 %v1954, 0.0
        %v2019 = vmax.f32 %v1959, 0.0
        %v2020 = vmax.f32 %v1964, 0.0
        %v2021 = vmax.f32 %v1969, 0.0
        %v2022 = vmax.f32 %v1974, 0.0
        %v2023 = vmax.f32 %v1979, 0.0
        %v2024 = vmax.f32 %v1984, 0.0
        %v2025 = vmax.f32 %v1989, 0.0
        %v2026 = vmax.f32 %v1994, 0.0
        %v2027 = vmax.f32 %v1999, 0.0
        %v2028 = vmax.f32 %v2004, 0.0
        %v2029 = vmax.f32 %v2009, 0.0
        %v2030 = vmax.f32 %v2014, 0.0
        %v2031 = vrot.slane %v2017, 6
        %v2032 = vrot.slane %v2018, 6
        %v2033 = vrot.slane %v2019, 6
        %v2034 = vrot.slane %v2020, 6
        %v2035 = vrot.slane %v2021, 6
        %v2036 = vrot.slane %v2022, 6
        %v2037 = vrot.slane %v2023, 6
        %v2038 = vrot.slane %v2024, 6
        %v2039 = vrot.slane %v2025, 6
        %v2040 = vrot.slane %v2026, 6
        %v2041 = vrot.slane %v2027, 6
        %v2042 = vrot.slane %v2028, 6
        %v2043 = vrot.slane %v2029, 6
        %v2044 = vrot.slane %v2030, 6
        %v2045 = vsel %vm1690, %v2043, %v2044
        %v2046 = vsel %vm1690, %v2042, %v2043
        %v2047 = vsel %vm1690, %v2041, %v2042
        %v2048 = vsel %vm1690, %v2040, %v2041
        %v2049 = vsel %vm1690, %v2039, %v2040
        %v2050 = vsel %vm1690, %v2038, %v2039
        %v2051 = vsel %vm1690, %v2037, %v2038
        %v2052 = vsel %vm1690, %v2036, %v2037
        %v2053 = vsel %vm1690, %v2035, %v2036
        %v2054 = vsel %vm1690, %v2034, %v2035
        %v2055 = vsel %vm1690, %v2033, %v2034
        %v2056 = vsel %vm1690, %v2032, %v2033
        %v2057 = vsel %vm1690, %v2031, %v2032
        %v2058 = vsel %vm1690, %v2044, %v2031
        %v2059 = vsel %vm1733, %v2058, 0.0
        %v2060 = vsel %vm1734, %v2057, 0.0
        %v2061 = vsel %vm1735, %v2056, 0.0
        %v2062 = vsel %vm1736, %v2055, 0.0
        %v2063 = vsel %vm1737, %v2054, 0.0
        %v2064 = vsel %vm1738, %v2053, 0.0
        %v2065 = vsel %vm1739, %v2052, 0.0
        %v2066 = vsel %vm1740, %v2051, 0.0
        %v2067 = vsel %vm1741, %v2050, 0.0
        %v2068 = vsel %vm1742, %v2049, 0.0
        %v2069 = vsel %vm1743, %v2048, 0.0
        %v2070 = vsel %vm1744, %v2047, 0.0
        %v2071 = vsel %vm1745, %v2046, 0.0
        %v2072 = vsel %vm1746, %v2045, 0.0
        %2087 = vrot.lane.b32.xlu0 %v2017, 8
        %v2088 = vpop.permute.xlu0 %2087
        %2089 = vrot.lane.b32.xlu0 %v2018, 8
        %v2090 = vpop.permute.xlu0 %2089
        %2091 = vrot.lane.b32.xlu0 %v2019, 8
        %v2092 = vpop.permute.xlu0 %2091
        %2093 = vrot.lane.b32.xlu0 %v2020, 8
        %v2094 = vpop.permute.xlu0 %2093
        %2095 = vrot.lane.b32.xlu0 %v2021, 8
        %v2096 = vpop.permute.xlu0 %2095
        %2097 = vrot.lane.b32.xlu0 %v2022, 8
        %v2098 = vpop.permute.xlu0 %2097
        %2099 = vrot.lane.b32.xlu0 %v2023, 8
        %v2100 = vpop.permute.xlu0 %2099
        %2101 = vrot.lane.b32.xlu0 %v2024, 8
        %v2102 = vpop.permute.xlu0 %2101
        %2103 = vrot.lane.b32.xlu0 %v2025, 8
        %v2104 = vpop.permute.xlu0 %2103
        %2105 = vrot.lane.b32.xlu0 %v2026, 8
        %v2106 = vpop.permute.xlu0 %2105
        %2107 = vrot.lane.b32.xlu0 %v2027, 8
        %v2108 = vpop.permute.xlu0 %2107
        %2109 = vrot.lane.b32.xlu0 %v2028, 8
        %v2110 = vpop.permute.xlu0 %2109
        %2111 = vrot.lane.b32.xlu0 %v2029, 8
        %v2112 = vpop.permute.xlu0 %2111
        %2113 = vrot.lane.b32.xlu0 %v2030, 8
        %v2114 = vpop.permute.xlu0 %2113
        %v2129 = vsel %vm968, %v2059, %v2088
        %v2130 = vsel %vm968, %v2060, %v2090
        %v2131 = vsel %vm968, %v2061, %v2092
        %v2132 = vsel %vm968, %v2062, %v2094
        %v2133 = vsel %vm968, %v2063, %v2096
        %v2134 = vsel %vm968, %v2064, %v2098
        %v2135 = vsel %vm968, %v2065, %v2100
        %v2136 = vsel %vm968, %v2066, %v2102
        %v2137 = vsel %vm968, %v2067, %v2104
        %v2138 = vsel %vm968, %v2068, %v2106
        %v2139 = vsel %vm968, %v2069, %v2108
        %v2140 = vsel %vm968, %v2070, %v2110
        %v2141 = vsel %vm968, %v2071, %v2112
        %v2142 = vsel %vm968, %v2072, %v2114
        %v2143 = vld [vmem:[%s9] sm:$0xff]
        %v2144 = vld [vmem:[%s9 + $0x8] sm:$0xff]
        %v2145 = vld [vmem:[%s10] sm:$0x1]
        %v2147 = vlaneseq
        %v2148 = vshrl.u32 %v2147, 7
        %v2149 = vsub.s32 0, %v2148
        %v2150 = vrot.slane %v2145, %v2149
        %v2153 = vsel %vm1281, %v2129, 0
        %v2156 = vsel %vm1281, %v2130, 0
        %v2159 = vsel %vm1281, %v2131, 0
        %v2162 = vsel %vm1281, %v2132, 0
        %v2165 = vsel %vm1281, %v2133, 0
        %v2168 = vsel %vm1281, %v2134, 0
        %v2171 = vsel %vm1281, %v2135, 0
        %v2174 = vsel %vm1281, %v2136, 0
        %v2177 = vsel %vm1281, %v2137, 0
        %v2180 = vsel %vm1281, %v2138, 0
        %v2183 = vsel %vm1281, %v2139, 0
        %v2186 = vsel %vm1281, %v2140, 0
        %v2189 = vsel %vm1281, %v2141, 0
        %v2192 = vsel %vm1281, %v2142, 0
        %2194 = vmatprep.subr.mxu0 0.0
        %2195 = vmatpush1.msra.mxu0 %v2143
        %2196 = vmatprep.subr.mxu0 0.0
        %2197 = vmatpush1.msra.mxu0 %v2144
        %2198 = vmatprep.subr.mxu0 0.0
        %2199 = vmatpush1.msra.mxu0 0.0
        %2200 = vmatprep.subr.mxu0 0.0
        %2201 = vmatpush1.msra.mxu0 0.0
        %2202 = vmatprep.subr.mxu0 0.0
        %2203 = vmatpush1.msra.mxu0 0.0
        %2204 = vmatprep.subr.mxu0 0.0
        %2205 = vmatpush1.msra.mxu0 0.0
        %2206 = vmatprep.subr.mxu0 0.0
        %2207 = vmatpush1.msra.mxu0 0.0
        %2208 = vmatprep.subr.mxu0 0.0
        %2209 = vmatpush1.msra.mxu0 0.0
        %2210 = vmatprep.subr.mxu0 0.0
        %2211 = vmatpush1.msra.mxu0 0.0
        %2212 = vmatprep.subr.mxu0 0.0
        %2213 = vmatpush1.msra.mxu0 0.0
        %2214 = vmatprep.subr.mxu0 0.0
        %2215 = vmatpush1.msra.mxu0 0.0
        %2216 = vmatprep.subr.mxu0 0.0
        %2217 = vmatpush1.msra.mxu0 0.0
        %2218 = vmatprep.subr.mxu0 0.0
        %2219 = vmatpush1.msra.mxu0 0.0
        %2220 = vmatprep.subr.mxu0 0.0
        %2221 = vmatpush1.msra.mxu0 0.0
        %2222 = vmatprep.subr.mxu0 0.0
        %2223 = vmatpush1.msra.mxu0 0.0
        %2224 = vmatprep.subr.mxu0 0.0
        %2225 = vmatpush1.msra.mxu0 0.0
        %2226 = vmatprep.subr.mxu0 0.0
        %2227 = vmatpush1.msra.mxu0 0.0
        %2228 = vmatprep.subr.mxu0 0.0
        %2229 = vmatpush1.msra.mxu0 0.0
        %2230 = vmatprep.subr.mxu0 0.0
        %2231 = vmatpush1.msra.mxu0 0.0
        %2232 = vmatprep.subr.mxu0 0.0
        %2233 = vmatpush1.msra.mxu0 0.0
        %2234 = vmatprep.subr.mxu0 0.0
        %2235 = vmatpush1.msra.mxu0 0.0
        %2236 = vmatprep.subr.mxu0 0.0
        %2237 = vmatpush1.msra.mxu0 0.0
        %2238 = vmatprep.subr.mxu0 0.0
        %2239 = vmatpush1.msra.mxu0 0.0
        %2240 = vmatprep.subr.mxu0 0.0
        %2241 = vmatpush1.msra.mxu0 0.0
        %2242 = vmatprep.subr.mxu0 0.0
        %2243 = vmatpush1.msra.mxu0 0.0
        %2244 = vmatprep.subr.mxu0 0.0
        %2245 = vmatpush1.msra.mxu0 0.0
        %2246 = vmatprep.subr.mxu0 0.0
        %2247 = vmatpush1.msra.mxu0 0.0
        %2248 = vmatprep.subr.mxu0 0.0
        %2249 = vmatpush1.msra.mxu0 0.0
        %2250 = vmatprep.subr.mxu0 0.0
        %2251 = vmatpush1.msra.mxu0 0.0
        %2252 = vmatprep.subr.mxu0 0.0
        %2253 = vmatpush1.msra.mxu0 0.0
        %2254 = vmatprep.subr.mxu0 0.0
        %2255 = vmatpush1.msra.mxu0 0.0
        %2256 = vmatprep.subr.mxu0 0.0
        %2257 = vmatpush1.msra.mxu0 0.0
        %2258 = vmatprep.mubr.f32.mxu0 0.0
        %2259 = vmatmul.mubr.f32.gmra.mrb[0].mxu0 %v2153
        %v2260 = vpop.f32.mrb[0].mxu0
        %v2261 = vpop.f32.mrb[0].mxu0
        %2262 = vmatprep.mubr.f32.mxu0 0.0
        %2263 = vmatmul.mubr.f32.gmra.mrb[0].mxu0 %v2156
        %v2264 = vpop.f32.mrb[0].mxu0
        %v2265 = vadd.f32 %v2150, %v2264
        %v2266 = vpop.f32.mrb[0].mxu0
        %2267 = vmatprep.mubr.f32.mxu0 0.0
        %2268 = vmatmul.mubr.f32.gmra.mrb[0].mxu0 %v2159
        %v2269 = vpop.f32.mrb[0].mxu0
        %v2270 = vpop.f32.mrb[0].mxu0
        %2271 = vmatprep.mubr.f32.mxu0 0.0
        %2272 = vmatmul.mubr.f32.gmra.mrb[0].mxu0 %v2162
        %v2273 = vpop.f32.mrb[0].mxu0
        %v2274 = vadd.f32 %v2150, %v2273
        %v2275 = vpop.f32.mrb[0].mxu0
        %2276 = vmatprep.mubr.f32.mxu0 0.0
        %2277 = vmatmul.mubr.f32.gmra.mrb[0].mxu0 %v2165
        %v2278 = vpop.f32.mrb[0].mxu0
        %v2279 = vpop.f32.mrb[0].mxu0
        %2280 = vmatprep.mubr.f32.mxu0 0.0
        %2281 = vmatmul.mubr.f32.gmra.mrb[0].mxu0 %v2168
        %v2282 = vpop.f32.mrb[0].mxu0
        %v2283 = vadd.f32 %v2150, %v2282
        %v2284 = vpop.f32.mrb[0].mxu0
        %2285 = vmatprep.mubr.f32.mxu0 0.0
        %2286 = vmatmul.mubr.f32.gmra.mrb[0].mxu0 %v2171
        %v2287 = vpop.f32.mrb[0].mxu0
        %v2288 = vpop.f32.mrb[0].mxu0
        %2289 = vmatprep.mubr.f32.mxu0 0.0
        %2290 = vmatmul.mubr.f32.gmra.mrb[0].mxu0 %v2174
        %v2291 = vpop.f32.mrb[0].mxu0
        %v2292 = vadd.f32 %v2150, %v2291
        %v2293 = vpop.f32.mrb[0].mxu0
        %2294 = vmatprep.mubr.f32.mxu0 0.0
        %2295 = vmatmul.mubr.f32.gmra.mrb[0].mxu0 %v2177
        %v2296 = vpop.f32.mrb[0].mxu0
        %v2297 = vpop.f32.mrb[0].mxu0
        %2298 = vmatprep.mubr.f32.mxu0 0.0
        %2299 = vmatmul.mubr.f32.gmra.mrb[0].mxu0 %v2180
        %v2300 = vpop.f32.mrb[0].mxu0
        %v2301 = vadd.f32 %v2150, %v2300
        %v2302 = vpop.f32.mrb[0].mxu0
        %2303 = vmatprep.mubr.f32.mxu0 0.0
        %2304 = vmatmul.mubr.f32.gmra.mrb[0].mxu0 %v2183
        %v2305 = vpop.f32.mrb[0].mxu0
        %v2306 = vpop.f32.mrb[0].mxu0
        %2307 = vmatprep.mubr.f32.mxu0 0.0
        %2308 = vmatmul.mubr.f32.gmra.mrb[0].mxu0 %v2186
        %v2309 = vpop.f32.mrb[0].mxu0
        %v2310 = vadd.f32 %v2150, %v2309
        %v2311 = vpop.f32.mrb[0].mxu0
        %2312 = vmatprep.mubr.f32.mxu0 0.0
        %2313 = vmatmul.mubr.f32.gmra.mrb[0].mxu0 %v2189
        %v2314 = vpop.f32.mrb[0].mxu0
        %v2315 = vpop.f32.mrb[0].mxu0
        %2316 = vmatprep.mubr.f32.mxu0 0.0
        %2317 = vmatmul.mubr.f32.gmra.mrb[0].mxu0 %v2192
        %v2318 = vpop.f32.mrb[0].mxu0
        %v2319 = vadd.f32 %v2150, %v2318
        %v2320 = vpop.f32.mrb[0].mxu0
        %2321 = vdwg.mxu0
        %v2322 = vmax.f32 %v2265, 0.0
        %v2323 = vmax.f32 %v2274, 0.0
        %v2324 = vmax.f32 %v2283, 0.0
        %v2325 = vmax.f32 %v2292, 0.0
        %v2326 = vmax.f32 %v2301, 0.0
        %v2327 = vmax.f32 %v2310, 0.0
        %v2328 = vmax.f32 %v2319, 0.0
        %v2329 = vadd.f32 %v2322, %v1663
        %v2330 = vadd.f32 %v2323, %v1665
        %v2331 = vadd.f32 %v2324, %v1667
        %v2332 = vadd.f32 %v2325, %v1669
        %v2333 = vadd.f32 %v2326, %v1671
        %v2334 = vadd.f32 %v2327, %v1673
        %v2335 = vadd.f32 %v2328, %v1675
        %v2336 = vmax.f32 %v2329, 0.0
        %v2337 = vmax.f32 %v2330, 0.0
        %v2338 = vmax.f32 %v2331, 0.0
        %v2339 = vmax.f32 %v2332, 0.0
        %v2340 = vmax.f32 %v2333, 0.0
        %v2341 = vmax.f32 %v2334, 0.0
        %v2342 = vmax.f32 %v2335, 0.0
        %v2343 = vld [vmem:[%s11] sm:$0xff]
        %v2344 = vld [vmem:[%s12] sm:$0x1]
        %v2346 = vlaneseq
        %v2347 = vshrl.u32 %v2346, 7
        %v2348 = vsub.s32 0, %v2347
        %v2349 = vrot.slane %v2344, %v2348
        %v2358 = vrot.slane %v2336, 7
        %v2359 = vrot.slane %v2337, 6
        %vm2360 = vcmask 1041409
        %v2361 = vsel %vm2360, %v2359, %v2358
        %v2362 = vrot.slane %v2338, 5
        %vm2363 = vcmask 1042434
        %v2364 = vsel %vm2363, %v2362, %v2361
        %v2365 = vrot.slane %v2339, 4
        %vm2366 = vcmask 1043459
        %v2367 = vsel %vm2366, %v2365, %v2364
        %v2368 = vrot.slane %v2340, 3
        %vm2369 = vcmask 1044484
        %v2370 = vsel %vm2369, %v2368, %v2367
        %v2371 = vrot.slane %v2341, 2
        %vm2372 = vcmask 1045509
        %v2373 = vsel %vm2372, %v2371, %v2370
        %v2374 = vrot.slane %v2342, 1
        %vm2375 = vcmask 1046534
        %v2376 = vsel %vm2375, %v2374, %v2373
        %v2377 = vsel %vm968, %v2376, 0
        %2379 = vmatprep.subr.mxu0 0.0
        %2380 = vmatpush1.msra.mxu0 %v2343
        %2381 = vmatprep.subr.mxu0 0.0
        %2382 = vmatpush1.msra.mxu0 0.0
        %2383 = vmatprep.subr.mxu0 0.0
        %2384 = vmatpush1.msra.mxu0 0.0
        %2385 = vmatprep.subr.mxu0 0.0
        %2386 = vmatpush1.msra.mxu0 0.0
        %2387 = vmatprep.subr.mxu0 0.0
        %2388 = vmatpush1.msra.mxu0 0.0
        %2389 = vmatprep.subr.mxu0 0.0
        %2390 = vmatpush1.msra.mxu0 0.0
        %2391 = vmatprep.subr.mxu0 0.0
        %2392 = vmatpush1.msra.mxu0 0.0
        %2393 = vmatprep.subr.mxu0 0.0
        %2394 = vmatpush1.msra.mxu0 0.0
        %2395 = vmatprep.subr.mxu0 0.0
        %2396 = vmatpush1.msra.mxu0 0.0
        %2397 = vmatprep.subr.mxu0 0.0
        %2398 = vmatpush1.msra.mxu0 0.0
        %2399 = vmatprep.subr.mxu0 0.0
        %2400 = vmatpush1.msra.mxu0 0.0
        %2401 = vmatprep.subr.mxu0 0.0
        %2402 = vmatpush1.msra.mxu0 0.0
        %2403 = vmatprep.subr.mxu0 0.0
        %2404 = vmatpush1.msra.mxu0 0.0
        %2405 = vmatprep.subr.mxu0 0.0
        %2406 = vmatpush1.msra.mxu0 0.0
        %2407 = vmatprep.subr.mxu0 0.0
        %2408 = vmatpush1.msra.mxu0 0.0
        %2409 = vmatprep.subr.mxu0 0.0
        %2410 = vmatpush1.msra.mxu0 0.0
        %2411 = vmatprep.subr.mxu0 0.0
        %2412 = vmatpush1.msra.mxu0 0.0
        %2413 = vmatprep.subr.mxu0 0.0
        %2414 = vmatpush1.msra.mxu0 0.0
        %2415 = vmatprep.subr.mxu0 0.0
        %2416 = vmatpush1.msra.mxu0 0.0
        %2417 = vmatprep.subr.mxu0 0.0
        %2418 = vmatpush1.msra.mxu0 0.0
        %2419 = vmatprep.subr.mxu0 0.0
        %2420 = vmatpush1.msra.mxu0 0.0
        %2421 = vmatprep.subr.mxu0 0.0
        %2422 = vmatpush1.msra.mxu0 0.0
        %2423 = vmatprep.subr.mxu0 0.0
        %2424 = vmatpush1.msra.mxu0 0.0
        %2425 = vmatprep.subr.mxu0 0.0
        %2426 = vmatpush1.msra.mxu0 0.0
        %2427 = vmatprep.subr.mxu0 0.0
        %2428 = vmatpush1.msra.mxu0 0.0
        %2429 = vmatprep.subr.mxu0 0.0
        %2430 = vmatpush1.msra.mxu0 0.0
        %2431 = vmatprep.subr.mxu0 0.0
        %2432 = vmatpush1.msra.mxu0 0.0
        %2433 = vmatprep.subr.mxu0 0.0
        %2434 = vmatpush1.msra.mxu0 0.0
        %2435 = vmatprep.subr.mxu0 0.0
        %2436 = vmatpush1.msra.mxu0 0.0
        %2437 = vmatprep.subr.mxu0 0.0
        %2438 = vmatpush1.msra.mxu0 0.0
        %2439 = vmatprep.subr.mxu0 0.0
        %2440 = vmatpush1.msra.mxu0 0.0
        %2441 = vmatprep.subr.mxu0 0.0
        %2442 = vmatpush1.msra.mxu0 0.0
        %2443 = vmatprep.mubr.f32.mxu0 0.0
        %2444 = vmatmul.mubr.f32.gmra.mrb[0].mxu0 %v2377
        %v2445 = vpop.f32.mrb[0].mxu0
        %v2446 = vadd.f32 %v2349, %v2445
        %v2447 = vpop.f32.mrb[0].mxu0
        %2448 = vdwg.mxu0
        %v2449 = vmax.f32 %v2446, 0.0
        %v2450 = vld [vmem:[%s13] sm:$0xff]
        %v2451 = vld [vmem:[%s13 + $0x8] sm:$0xff]
        %v2452 = vld [vmem:[%s13 + $0x10] sm:$0xff]
        %v2453 = vld [vmem:[%s13 + $0x18] sm:$0xff]
        %v2454 = vld [vmem:[%s14] sm:$0x1]
        %v2456 = vlaneseq
        %v2457 = vshrl.u32 %v2456, 7
        %v2458 = vsub.s32 0, %v2457
        %v2459 = vrot.slane %v2454, %v2458
        %vm2461 = vcmask 261120
        %v2463 = vsel %vm2461, %v2449, 0
        %2465 = vmatprep.subr.mxu0 0.0
        %2466 = vmatpush1.msra.mxu0 %v2450
        %2467 = vmatprep.subr.mxu0 0.0
        %2468 = vmatpush1.msra.mxu0 %v2451
        %2469 = vmatprep.subr.mxu0 0.0
        %2470 = vmatpush1.msra.mxu0 %v2452
        %2471 = vmatprep.subr.mxu0 0.0
        %2472 = vmatpush1.msra.mxu0 %v2453
        %2473 = vmatprep.subr.mxu0 0.0
        %2474 = vmatpush1.msra.mxu0 0.0
        %2475 = vmatprep.subr.mxu0 0.0
        %2476 = vmatpush1.msra.mxu0 0.0
        %2477 = vmatprep.subr.mxu0 0.0
        %2478 = vmatpush1.msra.mxu0 0.0
        %2479 = vmatprep.subr.mxu0 0.0
        %2480 = vmatpush1.msra.mxu0 0.0
        %2481 = vmatprep.subr.mxu0 0.0
        %2482 = vmatpush1.msra.mxu0 0.0
        %2483 = vmatprep.subr.mxu0 0.0
        %2484 = vmatpush1.msra.mxu0 0.0
        %2485 = vmatprep.subr.mxu0 0.0
        %2486 = vmatpush1.msra.mxu0 0.0
        %2487 = vmatprep.subr.mxu0 0.0
        %2488 = vmatpush1.msra.mxu0 0.0
        %2489 = vmatprep.subr.mxu0 0.0
        %2490 = vmatpush1.msra.mxu0 0.0
        %2491 = vmatprep.subr.mxu0 0.0
        %2492 = vmatpush1.msra.mxu0 0.0
        %2493 = vmatprep.subr.mxu0 0.0
        %2494 = vmatpush1.msra.mxu0 0.0
        %2495 = vmatprep.subr.mxu0 0.0
        %2496 = vmatpush1.msra.mxu0 0.0
        %2497 = vmatprep.subr.mxu0 0.0
        %2498 = vmatpush1.msra.mxu0 0.0
        %2499 = vmatprep.subr.mxu0 0.0
        %2500 = vmatpush1.msra.mxu0 0.0
        %2501 = vmatprep.subr.mxu0 0.0
        %2502 = vmatpush1.msra.mxu0 0.0
        %2503 = vmatprep.subr.mxu0 0.0
        %2504 = vmatpush1.msra.mxu0 0.0
        %2505 = vmatprep.subr.mxu0 0.0
        %2506 = vmatpush1.msra.mxu0 0.0
        %2507 = vmatprep.subr.mxu0 0.0
        %2508 = vmatpush1.msra.mxu0 0.0
        %2509 = vmatprep.subr.mxu0 0.0
        %2510 = vmatpush1.msra.mxu0 0.0
        %2511 = vmatprep.subr.mxu0 0.0
        %2512 = vmatpush1.msra.mxu0 0.0
        %2513 = vmatprep.subr.mxu0 0.0
        %2514 = vmatpush1.msra.mxu0 0.0
        %2515 = vmatprep.subr.mxu0 0.0
        %2516 = vmatpush1.msra.mxu0 0.0
        %2517 = vmatprep.subr.mxu0 0.0
        %2518 = vmatpush1.msra.mxu0 0.0
        %2519 = vmatprep.subr.mxu0 0.0
        %2520 = vmatpush1.msra.mxu0 0.0
        %2521 = vmatprep.subr.mxu0 0.0
        %2522 = vmatpush1.msra.mxu0 0.0
        %2523 = vmatprep.subr.mxu0 0.0
        %2524 = vmatpush1.msra.mxu0 0.0
        %2525 = vmatprep.subr.mxu0 0.0
        %2526 = vmatpush1.msra.mxu0 0.0
        %2527 = vmatprep.subr.mxu0 0.0
        %2528 = vmatpush1.msra.mxu0 0.0
        %2529 = vmatprep.mubr.f32.mxu0 0.0
        %2530 = vmatmul.mubr.f32.gmra.mrb[0].mxu0 %v2463
        %v2531 = vpop.f32.mrb[0].mxu0
        %v2532 = vadd.f32 %v2459, %v2531
        %v2533 = vpop.f32.mrb[0].mxu0
        %2534 = vdwg.mxu0
        %v2535 = vmax.f32 %v2532, 0.0
        %v2536 = vld [vmem:[%s15] sm:$0xff]
        %v2537 = vld [vmem:[%s15 + $0x8] sm:$0xff]
        %v2538 = vld [vmem:[%s15 + $0x10] sm:$0xff]
        %v2539 = vld [vmem:[%s15 + $0x18] sm:$0xff]
        %v2540 = vld [vmem:[%s16] sm:$0x1]
        %v2542 = vlaneseq
        %v2543 = vshrl.u32 %v2542, 7
        %v2544 = vsub.s32 0, %v2543
        %v2545 = vrot.slane %v2540, %v2544
        %v2548 = vsel %vm2461, %v2535, 0
        %2550 = vmatprep.subr.mxu0 0.0
        %2551 = vmatpush1.msra.mxu0 %v2536
        %2552 = vmatprep.subr.mxu0 0.0
        %2553 = vmatpush1.msra.mxu0 %v2537
        %2554 = vmatprep.subr.mxu0 0.0
        %2555 = vmatpush1.msra.mxu0 %v2538
        %2556 = vmatprep.subr.mxu0 0.0
        %2557 = vmatpush1.msra.mxu0 %v2539
        %2558 = vmatprep.subr.mxu0 0.0
        %2559 = vmatpush1.msra.mxu0 0.0
        %2560 = vmatprep.subr.mxu0 0.0
        %2561 = vmatpush1.msra.mxu0 0.0
        %2562 = vmatprep.subr.mxu0 0.0
        %2563 = vmatpush1.msra.mxu0 0.0
        %2564 = vmatprep.subr.mxu0 0.0
        %2565 = vmatpush1.msra.mxu0 0.0
        %2566 = vmatprep.subr.mxu0 0.0
        %2567 = vmatpush1.msra.mxu0 0.0
        %2568 = vmatprep.subr.mxu0 0.0
        %2569 = vmatpush1.msra.mxu0 0.0
        %2570 = vmatprep.subr.mxu0 0.0
        %2571 = vmatpush1.msra.mxu0 0.0
        %2572 = vmatprep.subr.mxu0 0.0
        %2573 = vmatpush1.msra.mxu0 0.0
        %2574 = vmatprep.subr.mxu0 0.0
        %2575 = vmatpush1.msra.mxu0 0.0
        %2576 = vmatprep.subr.mxu0 0.0
        %2577 = vmatpush1.msra.mxu0 0.0
        %2578 = vmatprep.subr.mxu0 0.0
        %2579 = vmatpush1.msra.mxu0 0.0
        %2580 = vmatprep.subr.mxu0 0.0
        %2581 = vmatpush1.msra.mxu0 0.0
        %2582 = vmatprep.subr.mxu0 0.0
        %2583 = vmatpush1.msra.mxu0 0.0
        %2584 = vmatprep.subr.mxu0 0.0
        %2585 = vmatpush1.msra.mxu0 0.0
        %2586 = vmatprep.subr.mxu0 0.0
        %2587 = vmatpush1.msra.mxu0 0.0
        %2588 = vmatprep.subr.mxu0 0.0
        %2589 = vmatpush1.msra.mxu0 0.0
        %2590 = vmatprep.subr.mxu0 0.0
        %2591 = vmatpush1.msra.mxu0 0.0
        %2592 = vmatprep.subr.mxu0 0.0
        %2593 = vmatpush1.msra.mxu0 0.0
        %2594 = vmatprep.subr.mxu0 0.0
        %2595 = vmatpush1.msra.mxu0 0.0
        %2596 = vmatprep.subr.mxu0 0.0
        %2597 = vmatpush1.msra.mxu0 0.0
        %2598 = vmatprep.subr.mxu0 0.0
        %2599 = vmatpush1.msra.mxu0 0.0
        %2600 = vmatprep.subr.mxu0 0.0
        %2601 = vmatpush1.msra.mxu0 0.0
        %2602 = vmatprep.subr.mxu0 0.0
        %2603 = vmatpush1.msra.mxu0 0.0
        %2604 = vmatprep.subr.mxu0 0.0
        %2605 = vmatpush1.msra.mxu0 0.0
        %2606 = vmatprep.subr.mxu0 0.0
        %2607 = vmatpush1.msra.mxu0 0.0
        %2608 = vmatprep.subr.mxu0 0.0
        %2609 = vmatpush1.msra.mxu0 0.0
        %2610 = vmatprep.subr.mxu0 0.0
        %2611 = vmatpush1.msra.mxu0 0.0
        %2612 = vmatprep.subr.mxu0 0.0
        %2613 = vmatpush1.msra.mxu0 0.0
        %2614 = vmatprep.mubr.f32.mxu0 0.0
        %2615 = vmatmul.mubr.f32.gmra.mrb[0].mxu0 %v2548
        %v2616 = vpop.f32.mrb[0].mxu0
        %v2617 = vadd.f32 %v2545, %v2616
        %v2618 = vpop.f32.mrb[0].mxu0
        %2619 = vdwg.mxu0
        %v2620 = vmax.f32 %v2617, 0.0
        %v2621 = vld [vmem:[%s17] sm:$0xff]
        %v2622 = vld [vmem:[%s17 + $0x8] sm:$0xff]
        %v2623 = vld [vmem:[%s17 + $0x10] sm:$0xff]
        %v2624 = vld [vmem:[%s17 + $0x18] sm:$0xff]
        %v2625 = vld [vmem:[%s18] sm:$0x1]
        %v2627 = vlaneseq
        %v2628 = vshrl.u32 %v2627, 7
        %v2629 = vsub.s32 0, %v2628
        %v2630 = vrot.slane %v2625, %v2629
        %v2633 = vsel %vm2461, %v2620, 0
        %2635 = vmatprep.subr.mxu0 0.0
        %2636 = vmatpush1.msra.mxu0 %v2621
        %2637 = vmatprep.subr.mxu0 0.0
        %2638 = vmatpush1.msra.mxu0 %v2622
        %2639 = vmatprep.subr.mxu0 0.0
        %2640 = vmatpush1.msra.mxu0 %v2623
        %2641 = vmatprep.subr.mxu0 0.0
        %2642 = vmatpush1.msra.mxu0 %v2624
        %2643 = vmatprep.subr.mxu0 0.0
        %2644 = vmatpush1.msra.mxu0 0.0
        %2645 = vmatprep.subr.mxu0 0.0
        %2646 = vmatpush1.msra.mxu0 0.0
        %2647 = vmatprep.subr.mxu0 0.0
        %2648 = vmatpush1.msra.mxu0 0.0
        %2649 = vmatprep.subr.mxu0 0.0
        %2650 = vmatpush1.msra.mxu0 0.0
        %2651 = vmatprep.subr.mxu0 0.0
        %2652 = vmatpush1.msra.mxu0 0.0
        %2653 = vmatprep.subr.mxu0 0.0
        %2654 = vmatpush1.msra.mxu0 0.0
        %2655 = vmatprep.subr.mxu0 0.0
        %2656 = vmatpush1.msra.mxu0 0.0
        %2657 = vmatprep.subr.mxu0 0.0
        %2658 = vmatpush1.msra.mxu0 0.0
        %2659 = vmatprep.subr.mxu0 0.0
        %2660 = vmatpush1.msra.mxu0 0.0
        %2661 = vmatprep.subr.mxu0 0.0
        %2662 = vmatpush1.msra.mxu0 0.0
        %2663 = vmatprep.subr.mxu0 0.0
        %2664 = vmatpush1.msra.mxu0 0.0
        %2665 = vmatprep.subr.mxu0 0.0
        %2666 = vmatpush1.msra.mxu0 0.0
        %2667 = vmatprep.subr.mxu0 0.0
        %2668 = vmatpush1.msra.mxu0 0.0
        %2669 = vmatprep.subr.mxu0 0.0
        %2670 = vmatpush1.msra.mxu0 0.0
        %2671 = vmatprep.subr.mxu0 0.0
        %2672 = vmatpush1.msra.mxu0 0.0
        %2673 = vmatprep.subr.mxu0 0.0
        %2674 = vmatpush1.msra.mxu0 0.0
        %2675 = vmatprep.subr.mxu0 0.0
        %2676 = vmatpush1.msra.mxu0 0.0
        %2677 = vmatprep.subr.mxu0 0.0
        %2678 = vmatpush1.msra.mxu0 0.0
        %2679 = vmatprep.subr.mxu0 0.0
        %2680 = vmatpush1.msra.mxu0 0.0
        %2681 = vmatprep.subr.mxu0 0.0
        %2682 = vmatpush1.msra.mxu0 0.0
        %2683 = vmatprep.subr.mxu0 0.0
        %2684 = vmatpush1.msra.mxu0 0.0
        %2685 = vmatprep.subr.mxu0 0.0
        %2686 = vmatpush1.msra.mxu0 0.0
        %2687 = vmatprep.subr.mxu0 0.0
        %2688 = vmatpush1.msra.mxu0 0.0
        %2689 = vmatprep.subr.mxu0 0.0
        %2690 = vmatpush1.msra.mxu0 0.0
        %2691 = vmatprep.subr.mxu0 0.0
        %2692 = vmatpush1.msra.mxu0 0.0
        %2693 = vmatprep.subr.mxu0 0.0
        %2694 = vmatpush1.msra.mxu0 0.0
        %2695 = vmatprep.subr.mxu0 0.0
        %2696 = vmatpush1.msra.mxu0 0.0
        %2697 = vmatprep.subr.mxu0 0.0
        %2698 = vmatpush1.msra.mxu0 0.0
        %2699 = vmatprep.mubr.f32.mxu0 0.0
        %2700 = vmatmul.mubr.f32.gmra.mrb[0].mxu0 %v2633
        %v2701 = vpop.f32.mrb[0].mxu0
        %v2702 = vadd.f32 %v2630, %v2701
        %v2703 = vpop.f32.mrb[0].mxu0
        %2704 = vdwg.mxu0
        %v2706 = vcombine.high %v2702, %v2702
        %v2708 = vunpack.c.l.s4 1966171168
        %v2709 = vunpack.c.0.s8 %v2708
        %v2710 = vlaneseq
        %v2711 = vshrl.u32 %v2710, 7
        %v2712 = vsub.s32 %v2709, %v2711
        %v2713 = vrot.slane %v2702, %v2712
        %v2715 = vunpack.c.l.s4 1966171168
        %v2716 = vunpack.c.0.s8 %v2715
        %v2717 = vlaneseq
        %v2718 = vshrl.u32 %v2717, 7
        %v2719 = vsub.s32 %v2716, %v2718
        %v2720 = vrot.slane %v2706, %v2719
        %v2721 = vcombine.high %v2713, %v2713
        %v2722 = vcombine.high %v2720, %v2720
        %v2724 = vunpack.c.l.s4 1966171168
        %v2725 = vunpack.c.0.s8 %v2724
        %v2726 = vlaneseq
        %v2727 = vshrl.u32 %v2726, 7
        %v2728 = vsub.s32 %v2725, %v2727
        %v2729 = vrot.slane %v2713, %v2728
        %v2731 = vunpack.c.l.s4 1966171168
        %v2732 = vunpack.c.0.s8 %v2731
        %v2733 = vlaneseq
        %v2734 = vshrl.u32 %v2733, 7
        %v2735 = vsub.s32 %v2732, %v2734
        %v2736 = vrot.slane %v2720, %v2735
        %v2738 = vunpack.c.l.s4 1966171168
        %v2739 = vunpack.c.0.s8 %v2738
        %v2740 = vlaneseq
        %v2741 = vshrl.u32 %v2740, 7
        %v2742 = vsub.s32 %v2739, %v2741
        %v2743 = vrot.slane %v2721, %v2742
        %v2745 = vunpack.c.l.s4 1966171168
        %v2746 = vunpack.c.0.s8 %v2745
        %v2747 = vlaneseq
        %v2748 = vshrl.u32 %v2747, 7
        %v2749 = vsub.s32 %v2746, %v2748
        %v2750 = vrot.slane %v2722, %v2749
        %v2751 = vcombine.high %v2729, %v2729
        %v2752 = vcombine.high %v2736, %v2736
        %v2753 = vcombine.high %v2743, %v2743
        %2761 = vst [vmem:[%s598] sm:$0x1] %v2729
        %2762 = vst [vmem:[%s598 + $0x1] sm:$0x1] %v2743
        %2763 = vst [vmem:[%s598 + $0x2] sm:$0x1] %v2751
        %2764 = vst [vmem:[%s598 + $0x3] sm:$0x1] %v2753
        %2765 = vst [vmem:[%s598 + $0x4] sm:$0x1] %v2736
        %2766 = vst [vmem:[%s598 + $0x5] sm:$0x1] %v2750
        %2767 = vst [vmem:[%s598 + $0x6] sm:$0x1] %v2752
        %s2768 = sand.u32 %s445, 1
        %s2769 = scalar_lea.sflag [#allocation3], %s2768
        %s2770 = sand.u32 %s445, 1
        %s2771 = smul.addr %s2770, 7
        %s2772 = scalar_lea.vmem [#allocation2], %s2771
        // Predicated region
        $region97: #{tpu_custom_call.1} parent=95 // pred_check
          %p2773 = pneg %p455
        $region98: #{tpu_custom_call.1} parent=95 // pred_check_branch
          %2775 = sbr.rel (%p2773) target = $region100
        $region99: #{tpu_custom_call.1} parent=95 // pred_region
          %s2776 = smul.u32 7, %s33
          %s2778 = ssub.s32 112, 112
          %2779 = vsyncadd %s2769, %s2778
          %s2780 = smul.addr %s2776, 16
          %s2781 = scalar_lea.hbm %s19, %s2780
          %s2782 = sshll.u32 %s2772, 4
          %s2783 = int_to_ptr.vmem [resolvable:$true] %s2782
          %2788 = dma.vmem_to_hbm [thread:$0]  %s2783, 112, %s2781, %s2769, 16, 16, 1
        $region100: #{tpu_custom_call.1} parent=95 // pred_fallthru
          _
      $region96: #{tpu_custom_call.1} parent=5 // pred_fallthru
        _
      %p2789 = scmp.le.s32.totalorder 2, %s28
      // Predicated region
      $region101: #{tpu_custom_call.1} parent=5 // pred_check
        %p2790 = pneg %p2789
      $region102: #{tpu_custom_call.1} parent=5 // pred_check_branch
        %2792 = sbr.rel (%p2790) target = $region104
      $region103: #{tpu_custom_call.1} parent=5 // pred_region
        %s2793 = ssub.s32 %s28, 2
        // Predicated region
        $region105: #{tpu_custom_call.1} parent=103 // pred_check
          %p2794 = pneg %p461
        $region106: #{tpu_custom_call.1} parent=103 // pred_check_branch
          %2796 = sbr.rel (%p2794) target = $region108
        $region107: #{tpu_custom_call.1} parent=103 // pred_region
          %s2797 = sand.u32 %s446, 1
          %s2798 = scalar_lea.sflag [#allocation3], %s2797
          %s2799 = sand.u32 %s446, 1
          %s2800 = smul.addr %s2799, 7
          %s2801 = scalar_lea.vmem [#allocation2], %s2800
          %2802 = dma.done %s2798, 112
        $region108: #{tpu_custom_call.1} parent=103 // pred_fallthru
          _
      $region104: #{tpu_custom_call.1} parent=5 // pred_fallthru
        _
    $region6: #{tpu_custom_call.1} parent=1 // loop_footer
      %s32 = sadd.s32 1, %s28
    $region7: #{tpu_custom_call.1} parent=1 // loop_footer_branch
      %27 = sbr.rel target = $region3
    $region8: #{tpu_custom_call.1} parent=1 // loop_exit
      _
    %2803 = vsyncpa [#allocation3], 1
    %s2804 = scalar_lea.sflag [#allocation3], 1
    %2805 = vsyncpa %s2804, 1

</llo_original>
